<compile_context>
chip_gen: v6e
topology: v6e:2x2x1
jax: 0.10.0
libtpu: 0.0.40
codegen_flags: <defaults>
</compile_context>

<pallas_src>
import functools

import jax
import jax.numpy as jnp
from jax import lax
from jax.experimental import pallas as pl
from jax.experimental.pallas import tpu as pltpu


def _dwsep_conv_kernel(x_ref, dww_ref, pww_ref, bias_ref, o_ref, xpad_ref, *,
                       row_block):
    """One (batch n, in-channel tile ci) grid step.

    x_ref    : (1, H, W, TC)       unpadded NHWC input tile (channels on lanes)
    dww_ref  : (9, TC)      f32    depthwise 3x3 taps, tap-major
    pww_ref  : (TC, Cout)   bf16   pointwise 1x1 weight tile
    bias_ref : (1, Cout)    f32    folded bias (pw_w @ dw_b), added once
    o_ref    : (1, H*W, Cout) f32  output; same block across ci -> accumulator
    xpad_ref : (H+2, W+2, TC) f32  VMEM halo scratch (border stays zero)
    """
    ci = pl.program_id(1)
    _, H, W, TC = x_ref.shape
    RB = row_block
    n_rb = H // RB

    @pl.when(ci == 0)
    def _init():
        o_ref[...] = jnp.zeros_like(o_ref)
        xpad_ref[...] = jnp.zeros_like(xpad_ref)   # zero the halo border once

    # Halo handled in VMEM: copy the unpadded tile into the scratch interior.
    # The 1-pixel border was zeroed above and is never overwritten, so no
    # padded copy of the input ever touches HBM.
    xpad_ref[1:H + 1, 1:W + 1, :] = x_ref[0]

    pww = pww_ref[...]                                   # (TC, Cout) bf16
    taps = dww_ref[...]                                  # (9, TC)    f32
    tap_vecs = [taps[k:k + 1, :] for k in range(9)]      # hoisted out of loop

    def row_body(rb, carry):
        r0 = pl.multiple_of(rb * RB, RB)
        # Depthwise 3x3 on a row chunk: nine ref-offset window loads (offset
        # vld, no value-slice relayouts); per-channel taps are lane vectors
        # broadcast over sublanes -> pure VPU work.
        dw = xpad_ref[pl.ds(r0, RB), 0:W, :] * tap_vecs[0]
        for kh in range(3):
            for kw in range(3):
                if kh == 0 and kw == 0:
                    continue
                win = xpad_ref[pl.ds(r0 + kh, RB), kw:kw + W, :]
                dw = dw + win * tap_vecs[kh * 3 + kw]
        # Pointwise 1x1 as a bf16 MXU matmul with f32 accumulation, fused per
        # row chunk so the depthwise intermediate stays small (no spills) and
        # next-chunk VPU work can overlap this chunk's MXU work.
        contrib = jnp.dot(dw.reshape(RB * W, TC).astype(jnp.bfloat16), pww,
                          preferred_element_type=jnp.float32)
        o0 = pl.multiple_of(rb * (RB * W), RB * W)
        o_ref[0, pl.ds(o0, RB * W), :] += contrib
        return carry

    lax.fori_loop(0, n_rb, row_body, 0, unroll=(n_rb <= 8))

    @pl.when(ci == pl.num_programs(1) - 1)
    def _finalize():
        o_ref[0] += bias_ref[...]                        # folded dw-bias, once


def _pick_row_block(H, W, target_rows_times_w=128):
    """Largest divisor of H with row_block * W <= target (>= 1)."""
    best = 1
    for d in range(1, H + 1):
        if H % d == 0 and d * W <= target_rows_times_w:
            best = d
    return best


@functools.partial(jax.jit, static_argnames=("c_tile", "row_block"))
def depthwise_separable_conv(x, dw_w, dw_b, pw_w, *, c_tile=None,
                             row_block=None):
    """Fused depthwise(3x3, pad=1, stride=1, bias) + pointwise(1x1, no bias).

    x    : (N, C, H, W)   float32
    dw_w : (C, 3, 3)      depthwise weights (PyTorch (C,1,3,3) squeezed)
    dw_b : (C,)           depthwise bias
    pw_w : (Cout, C)      pointwise weights (PyTorch (Cout,C,1,1) squeezed)
    returns (N, Cout, H, W) float32
    """
    N, C, H, W = x.shape
    Cout = pw_w.shape[0]

    if c_tile is None:
        c_tile = C if C <= 128 else 128
    n_ci = -(-C // c_tile)
    C_pad = n_ci * c_tile

    if row_block is None:
        row_block = _pick_row_block(H, W)
    assert H % row_block == 0

    # NHWC so channels sit on the lane axis inside the kernel.  (No jnp.pad:
    # the spatial halo is handled in-kernel via a zeroed VMEM scratch.)
    x_nhwc = jnp.transpose(x, (0, 2, 3, 1)).astype(jnp.float32)

    dww = dw_w.reshape(C, 9).T.astype(jnp.float32)          # (9, C) tap-major
    pwt = pw_w.T.astype(jnp.bfloat16)                       # (C, Cout) for MXU
    # Depthwise bias folded through the pointwise conv: added once at the end.
    bias_out = (pw_w.astype(jnp.float32) @ dw_b.astype(jnp.float32)
                ).reshape(1, Cout)

    if C_pad != C:   # pad channels instead of rejecting awkward C
        x_nhwc = jnp.pad(x_nhwc, ((0, 0), (0, 0), (0, 0), (0, C_pad - C)))
        dww = jnp.pad(dww, ((0, 0), (0, C_pad - C)))
        pwt = jnp.pad(pwt, ((0, C_pad - C), (0, 0)))

    kernel = functools.partial(_dwsep_conv_kernel, row_block=row_block)

    out = pl.pallas_call(
        kernel,
        out_shape=jax.ShapeDtypeStruct((N, H * W, Cout), jnp.float32),
        grid_spec=pltpu.PrefetchScalarGridSpec(
            num_scalar_prefetch=0,
            grid=(N, n_ci),
            in_specs=[
                pl.BlockSpec((1, H, W, c_tile),
                             lambda n, ci: (n, 0, 0, ci)),        # input tile
                pl.BlockSpec((9, c_tile), lambda n, ci: (0, ci)),    # dw taps
                pl.BlockSpec((c_tile, Cout), lambda n, ci: (ci, 0)),  # pw wgt
                pl.BlockSpec((1, Cout), lambda n, ci: (0, 0)),    # folded bias
            ],
            out_specs=pl.BlockSpec((1, H * W, Cout), lambda n, ci: (n, 0, 0)),
            scratch_shapes=[
                pltpu.VMEM((H + 2, W + 2, c_tile), jnp.float32),  # halo buf
            ],
        ),
        compiler_params=pltpu.CompilerParams(
            dimension_semantics=("parallel", "arbitrary"),
            vmem_limit_bytes=64 * 1024 * 1024),
    )(x_nhwc, dww, pwt, bias_out)

    # (N, H*W, Cout) -> (N, Cout, H, W)
    return jnp.transpose(out.reshape(N, H, W, Cout), (0, 3, 1, 2))


def depthwise_separable_conv_ref(x, dw_w, dw_b, pw_w):
    """Pure-JAX reference mirroring the PyTorch forward."""
    N, C, H, W = x.shape
    xp = jnp.pad(x, ((0, 0), (0, 0), (1, 1), (1, 1)))
    dw = jnp.zeros((N, C, H, W), jnp.float32)
    for kh in range(3):
        for kw in range(3):
            dw = dw + xp[:, :, kh:kh + H, kw:kw + W] * \
                dw_w[None, :, kh, kw, None, None]
    dw = dw + dw_b[None, :, None, None]
    return jnp.einsum("oc,nchw->nohw", pw_w, dw)


if __name__ == "__main__":
    key = jax.random.PRNGKey(0)
    N, C_in, C_out, H, W = 2, 16, 32, 16, 16

    k_x, k_dw, k_db, k_pw = jax.random.split(key, 4)
    x = jax.random.normal(k_x, (N, C_in, H, W), dtype=jnp.float32)
    dw_w = jax.random.normal(k_dw, (C_in, 3, 3), dtype=jnp.float32) * (1.0 / 3.0)
    dw_b = jax.random.normal(k_db, (C_in,), dtype=jnp.float32) * 0.1
    pw_w = jax.random.normal(k_pw, (C_out, C_in), dtype=jnp.float32) * \
        (1.0 / jnp.sqrt(C_in))

    out = depthwise_separable_conv(x, dw_w, dw_b, pw_w)
    out = jax.block_until_ready(out)

    ref = depthwise_separable_conv_ref(x, dw_w, dw_b, pw_w)
    assert out.shape == (N, C_out, H, W)
    # Tolerance accounts for the bf16 MXU operands (f32 accumulation); any
    # structural bug (wrong tap / transposed weight / missing bias / bad halo)
    # produces O(0.1 - 1) errors and would still trip this check.
    assert jnp.allclose(out, ref, atol=5e-2, rtol=5e-2), "mismatch vs reference"

    print("KERNEL_OK")
</pallas_src>

<mosaic_0001>
module attributes {stable_mosaic.version = 11 : i64} {
  func.func @_dwsep_conv_kernel(%arg0: i32, %arg1: i32, %arg2: memref<1x16x16x16xf32, #tpu.memory_space<vmem>>, %arg3: memref<9x16xf32, #tpu.memory_space<vmem>>, %arg4: memref<16x32xbf16, #tpu.memory_space<vmem>>, %arg5: memref<1x32xf32, #tpu.memory_space<vmem>>, %arg6: memref<1x256x32xf32, #tpu.memory_space<vmem>>, %arg7: memref<18x18x16xf32, #tpu.memory_space<vmem>>) attributes {dimension_semantics = [#tpu.dimension_semantics<parallel>, #tpu.dimension_semantics<arbitrary>], iteration_bounds = array<i64: 2, 1>, scalar_prefetch = 0 : i64, scratch_operands = 1 : i64, tpu.core_type = #tpu.core_type<tc>, window_params = [{transform_indices = @transform_0, window_bounds = array<i64: 1, 16, 16, 16>}, {transform_indices = @transform_1, window_bounds = array<i64: 9, 16>}, {transform_indices = @transform_2, window_bounds = array<i64: 16, 32>}, {pipeline_mode = #tpu.pipeline_mode<synchronous>, transform_indices = @transform_3, window_bounds = array<i64: 1, 32>}, {transform_indices = @transform_4, window_bounds = array<i64: 1, 256, 32>}]} {
    %c0_i32 = arith.constant 0 : i32
    %0 = arith.cmpi eq, %arg1, %c0_i32 : i32
    %1 = arith.extui %0 : i1 to i32
    %c0_i32_0 = arith.constant 0 : i32
    %2 = arith.cmpi ne, %1, %c0_i32_0 : i32
    scf.if %2 {
      %cst_75 = arith.constant 0.000000e+00 : f32
      %172 = vector.broadcast %cst_75 : f32 to vector<1x256x32xf32>
      %c0_76 = arith.constant 0 : index
      %c0_77 = arith.constant 0 : index
      %c0_78 = arith.constant 0 : index
      %173 = vector.load %arg6[%c0_76, %c0_77, %c0_78] : memref<1x256x32xf32, #tpu.memory_space<vmem>>, vector<1x256x32xf32>
      tpu.vector_store %arg6[%c0_76, %c0_77, %c0_78], %172 {strides = array<i32>} : memref<1x256x32xf32, #tpu.memory_space<vmem>>, vector<1x256x32xf32>,
      %cst_79 = arith.constant 0.000000e+00 : f32
      %174 = vector.broadcast %cst_79 : f32 to vector<18x18x16xf32>
      %c0_80 = arith.constant 0 : index
      %c0_81 = arith.constant 0 : index
      %c0_82 = arith.constant 0 : index
      %175 = vector.load %arg7[%c0_80, %c0_81, %c0_82] : memref<18x18x16xf32, #tpu.memory_space<vmem>>, vector<18x18x16xf32>
      tpu.vector_store %arg7[%c0_80, %c0_81, %c0_82], %174 {strides = array<i32>} : memref<18x18x16xf32, #tpu.memory_space<vmem>>, vector<18x18x16xf32>,
    } else {
    }
    %c0 = arith.constant 0 : index
    %c0_1 = arith.constant 0 : index
    %c0_2 = arith.constant 0 : index
    %c0_3 = arith.constant 0 : index
    %3 = vector.load %arg2[%c0, %c0_1, %c0_2, %c0_3] : memref<1x16x16x16xf32, #tpu.memory_space<vmem>>, vector<1x16x16x16xf32>
    %4 = vector.shape_cast %3 : vector<1x16x16x16xf32> to vector<16x16x16xf32>
    %c1 = arith.constant 1 : index
    %c1_4 = arith.constant 1 : index
    %c0_5 = arith.constant 0 : index
    %5 = vector.load %arg7[%c1, %c1_4, %c0_5] : memref<18x18x16xf32, #tpu.memory_space<vmem>>, vector<16x16x16xf32>
    tpu.vector_store %arg7[%c1, %c1_4, %c0_5], %4 {strides = array<i32>} : memref<18x18x16xf32, #tpu.memory_space<vmem>>, vector<16x16x16xf32>,
    %c0_6 = arith.constant 0 : index
    %c0_7 = arith.constant 0 : index
    %6 = vector.load %arg4[%c0_6, %c0_7] : memref<16x32xbf16, #tpu.memory_space<vmem>>, vector<16x32xbf16>
    %c0_8 = arith.constant 0 : index
    %c0_9 = arith.constant 0 : index
    %7 = vector.load %arg3[%c0_8, %c0_9] : memref<9x16xf32, #tpu.memory_space<vmem>>, vector<9x16xf32>
    %8 = vector.extract_strided_slice %7 {offsets = [0, 0], sizes = [1, 16], strides = [1, 1]} : vector<9x16xf32> to vector<1x16xf32>
    %9 = vector.extract_strided_slice %7 {offsets = [1, 0], sizes = [1, 16], strides = [1, 1]} : vector<9x16xf32> to vector<1x16xf32>
    %10 = vector.extract_strided_slice %7 {offsets = [2, 0], sizes = [1, 16], strides = [1, 1]} : vector<9x16xf32> to vector<1x16xf32>
    %11 = vector.extract_strided_slice %7 {offsets = [3, 0], sizes = [1, 16], strides = [1, 1]} : vector<9x16xf32> to vector<1x16xf32>
    %12 = vector.extract_strided_slice %7 {offsets = [4, 0], sizes = [1, 16], strides = [1, 1]} : vector<9x16xf32> to vector<1x16xf32>
    %13 = vector.extract_strided_slice %7 {offsets = [5, 0], sizes = [1, 16], strides = [1, 1]} : vector<9x16xf32> to vector<1x16xf32>
    %14 = vector.extract_strided_slice %7 {offsets = [6, 0], sizes = [1, 16], strides = [1, 1]} : vector<9x16xf32> to vector<1x16xf32>
    %15 = vector.extract_strided_slice %7 {offsets = [7, 0], sizes = [1, 16], strides = [1, 1]} : vector<9x16xf32> to vector<1x16xf32>
    %16 = vector.extract_strided_slice %7 {offsets = [8, 0], sizes = [1, 16], strides = [1, 1]} : vector<9x16xf32> to vector<1x16xf32>
    %c0_i32_10 = arith.constant 0 : i32
    %c8_i32 = arith.constant 8 : i32
    %17 = arith.muli %c0_i32_10, %c8_i32 : i32
    %18 = tpu.assume_multiple %17, 8 : i32
    %19 = arith.index_cast %18 : i32 to index
    %c0_11 = arith.constant 0 : index
    %c0_12 = arith.constant 0 : index
    %20 = vector.load %arg7[%19, %c0_11, %c0_12] : memref<18x18x16xf32, #tpu.memory_space<vmem>>, vector<8x16x16xf32>
    %21 = vector.shape_cast %8 : vector<1x16xf32> to vector<1x1x16xf32>
    %22 = vector.broadcast %21 : vector<1x1x16xf32> to vector<8x16x16xf32>
    %23 = arith.mulf %20, %22 : vector<8x16x16xf32>
    %c0_i32_13 = arith.constant 0 : i32
    %24 = arith.addi %18, %c0_i32_13 : i32
    %25 = arith.index_cast %24 : i32 to index
    %c1_14 = arith.constant 1 : index
    %c0_15 = arith.constant 0 : index
    %26 = vector.load %arg7[%25, %c1_14, %c0_15] : memref<18x18x16xf32, #tpu.memory_space<vmem>>, vector<8x16x16xf32>
    %27 = vector.shape_cast %9 : vector<1x16xf32> to vector<1x1x16xf32>
    %28 = vector.broadcast %27 : vector<1x1x16xf32> to vector<8x16x16xf32>
    %29 = arith.mulf %26, %28 : vector<8x16x16xf32>
    %30 = arith.addf %23, %29 : vector<8x16x16xf32>
    %c0_i32_16 = arith.constant 0 : i32
    %31 = arith.addi %18, %c0_i32_16 : i32
    %32 = arith.index_cast %31 : i32 to index
    %c2 = arith.constant 2 : index
    %c0_17 = arith.constant 0 : index
    %33 = vector.load %arg7[%32, %c2, %c0_17] : memref<18x18x16xf32, #tpu.memory_space<vmem>>, vector<8x16x16xf32>
    %34 = vector.shape_cast %10 : vector<1x16xf32> to vector<1x1x16xf32>
    %35 = vector.broadcast %34 : vector<1x1x16xf32> to vector<8x16x16xf32>
    %36 = arith.mulf %33, %35 : vector<8x16x16xf32>
    %37 = arith.addf %30, %36 : vector<8x16x16xf32>
    %c1_i32 = arith.constant 1 : i32
    %38 = arith.addi %18, %c1_i32 : i32
    %39 = arith.index_cast %38 : i32 to index
    %c0_18 = arith.constant 0 : index
    %c0_19 = arith.constant 0 : index
    %40 = vector.load %arg7[%39, %c0_18, %c0_19] : memref<18x18x16xf32, #tpu.memory_space<vmem>>, vector<8x16x16xf32>
    %41 = vector.shape_cast %11 : vector<1x16xf32> to vector<1x1x16xf32>
    %42 = vector.broadcast %41 : vector<1x1x16xf32> to vector<8x16x16xf32>
    %43 = arith.mulf %40, %42 : vector<8x16x16xf32>
    %44 = arith.addf %37, %43 : vector<8x16x16xf32>
    %c1_i32_20 = arith.constant 1 : i32
    %45 = arith.addi %18, %c1_i32_20 : i32
    %46 = arith.index_cast %45 : i32 to index
    %c1_21 = arith.constant 1 : index
    %c0_22 = arith.constant 0 : index
    %47 = vector.load %arg7[%46, %c1_21, %c0_22] : memref<18x18x16xf32, #tpu.memory_space<vmem>>, vector<8x16x16xf32>
    %48 = vector.shape_cast %12 : vector<1x16xf32> to vector<1x1x16xf32>
    %49 = vector.broadcast %48 : vector<1x1x16xf32> to vector<8x16x16xf32>
    %50 = arith.mulf %47, %49 : vector<8x16x16xf32>
    %51 = arith.addf %44, %50 : vector<8x16x16xf32>
    %c1_i32_23 = arith.constant 1 : i32
    %52 = arith.addi %18, %c1_i32_23 : i32
    %53 = arith.index_cast %52 : i32 to index
    %c2_24 = arith.constant 2 : index
    %c0_25 = arith.constant 0 : index
    %54 = vector.load %arg7[%53, %c2_24, %c0_25] : memref<18x18x16xf32, #tpu.memory_space<vmem>>, vector<8x16x16xf32>
    %55 = vector.shape_cast %13 : vector<1x16xf32> to vector<1x1x16xf32>
    %56 = vector.broadcast %55 : vector<1x1x16xf32> to vector<8x16x16xf32>
    %57 = arith.mulf %54, %56 : vector<8x16x16xf32>
    %58 = arith.addf %51, %57 : vector<8x16x16xf32>
    %c2_i32 = arith.constant 2 : i32
    %59 = arith.addi %18, %c2_i32 : i32
    %60 = arith.index_cast %59 : i32 to index
    %c0_26 = arith.constant 0 : index
    %c0_27 = arith.constant 0 : index
    %61 = vector.load %arg7[%60, %c0_26, %c0_27] : memref<18x18x16xf32, #tpu.memory_space<vmem>>, vector<8x16x16xf32>
    %62 = vector.shape_cast %14 : vector<1x16xf32> to vector<1x1x16xf32>
    %63 = vector.broadcast %62 : vector<1x1x16xf32> to vector<8x16x16xf32>
    %64 = arith.mulf %61, %63 : vector<8x16x16xf32>
    %65 = arith.addf %58, %64 : vector<8x16x16xf32>
    %c2_i32_28 = arith.constant 2 : i32
    %66 = arith.addi %18, %c2_i32_28 : i32
    %67 = arith.index_cast %66 : i32 to index
    %c1_29 = arith.constant 1 : index
    %c0_30 = arith.constant 0 : index
    %68 = vector.load %arg7[%67, %c1_29, %c0_30] : memref<18x18x16xf32, #tpu.memory_space<vmem>>, vector<8x16x16xf32>
    %69 = vector.shape_cast %15 : vector<1x16xf32> to vector<1x1x16xf32>
    %70 = vector.broadcast %69 : vector<1x1x16xf32> to vector<8x16x16xf32>
    %71 = arith.mulf %68, %70 : vector<8x16x16xf32>
    %72 = arith.addf %65, %71 : vector<8x16x16xf32>
    %c2_i32_31 = arith.constant 2 : i32
    %73 = arith.addi %18, %c2_i32_31 : i32
    %74 = arith.index_cast %73 : i32 to index
    %c2_32 = arith.constant 2 : index
    %c0_33 = arith.constant 0 : index
    %75 = vector.load %arg7[%74, %c2_32, %c0_33] : memref<18x18x16xf32, #tpu.memory_space<vmem>>, vector<8x16x16xf32>
    %76 = vector.shape_cast %16 : vector<1x16xf32> to vector<1x1x16xf32>
    %77 = vector.broadcast %76 : vector<1x1x16xf32> to vector<8x16x16xf32>
    %78 = arith.mulf %75, %77 : vector<8x16x16xf32>
    %79 = arith.addf %72, %78 : vector<8x16x16xf32>
    %80 = vector.shape_cast %79 : vector<8x16x16xf32> to vector<128x16xf32>
    %81 = arith.truncf %80 : vector<128x16xf32> to vector<128x16xbf16>
    %cst = arith.constant dense<0.000000e+00> : vector<128x32xf32>
    %82 = tpu.matmul %81, %6, %cst {dimension_numbers = #tpu.dot_dimension_numbers<[1], [0], [0], [1], [0, 0, 1, 1], [], []>} : vector<128x16xbf16>, vector<16x32xbf16>, vector<128x32xf32> -> vector<128x32xf32>
    %c128_i32 = arith.constant 128 : i32
    %83 = arith.muli %c0_i32_10, %c128_i32 : i32
    %84 = tpu.assume_multiple %83, 128 : i32
    %c0_34 = arith.constant 0 : index
    %85 = arith.index_cast %84 : i32 to index
    %c0_35 = arith.constant 0 : index
    %86 = vector.load %arg6[%c0_34, %85, %c0_35] : memref<1x256x32xf32, #tpu.memory_space<vmem>>, vector<1x128x32xf32>
    %87 = vector.shape_cast %86 : vector<1x128x32xf32> to vector<128x32xf32>
    %88 = arith.addf %87, %82 : vector<128x32xf32>
    %c0_36 = arith.constant 0 : index
    %89 = arith.index_cast %84 : i32 to index
    %c0_37 = arith.constant 0 : index
    %90 = vector.load %arg6[%c0_36, %89, %c0_37] : memref<1x256x32xf32, #tpu.memory_space<vmem>>, vector<1x128x32xf32>
    %91 = vector.shape_cast %90 : vector<1x128x32xf32> to vector<128x32xf32>
    %92 = vector.shape_cast %88 : vector<128x32xf32> to vector<1x128x32xf32>
    tpu.vector_store %arg6[%c0_36, %89, %c0_37], %92 {strides = array<i32>} : memref<1x256x32xf32, #tpu.memory_space<vmem>>, vector<1x128x32xf32>,
    %c1_i32_38 = arith.constant 1 : i32
    %c8_i32_39 = arith.constant 8 : i32
    %93 = arith.muli %c1_i32_38, %c8_i32_39 : i32
    %94 = tpu.assume_multiple %93, 8 : i32
    %95 = arith.index_cast %94 : i32 to index
    %c0_40 = arith.constant 0 : index
    %c0_41 = arith.constant 0 : index
    %96 = vector.load %arg7[%95, %c0_40, %c0_41] : memref<18x18x16xf32, #tpu.memory_space<vmem>>, vector<8x16x16xf32>
    %97 = vector.shape_cast %8 : vector<1x16xf32> to vector<1x1x16xf32>
    %98 = vector.broadcast %97 : vector<1x1x16xf32> to vector<8x16x16xf32>
    %99 = arith.mulf %96, %98 : vector<8x16x16xf32>
    %c0_i32_42 = arith.constant 0 : i32
    %100 = arith.addi %94, %c0_i32_42 : i32
    %101 = arith.index_cast %100 : i32 to index
    %c1_43 = arith.constant 1 : index
    %c0_44 = arith.constant 0 : index
    %102 = vector.load %arg7[%101, %c1_43, %c0_44] : memref<18x18x16xf32, #tpu.memory_space<vmem>>, vector<8x16x16xf32>
    %103 = vector.shape_cast %9 : vector<1x16xf32> to vector<1x1x16xf32>
    %104 = vector.broadcast %103 : vector<1x1x16xf32> to vector<8x16x16xf32>
    %105 = arith.mulf %102, %104 : vector<8x16x16xf32>
    %106 = arith.addf %99, %105 : vector<8x16x16xf32>
    %c0_i32_45 = arith.constant 0 : i32
    %107 = arith.addi %94, %c0_i32_45 : i32
    %108 = arith.index_cast %107 : i32 to index
    %c2_46 = arith.constant 2 : index
    %c0_47 = arith.constant 0 : index
    %109 = vector.load %arg7[%108, %c2_46, %c0_47] : memref<18x18x16xf32, #tpu.memory_space<vmem>>, vector<8x16x16xf32>
    %110 = vector.shape_cast %10 : vector<1x16xf32> to vector<1x1x16xf32>
    %111 = vector.broadcast %110 : vector<1x1x16xf32> to vector<8x16x16xf32>
    %112 = arith.mulf %109, %111 : vector<8x16x16xf32>
    %113 = arith.addf %106, %112 : vector<8x16x16xf32>
    %c1_i32_48 = arith.constant 1 : i32
    %114 = arith.addi %94, %c1_i32_48 : i32
    %115 = arith.index_cast %114 : i32 to index
    %c0_49 = arith.constant 0 : index
    %c0_50 = arith.constant 0 : index
    %116 = vector.load %arg7[%115, %c0_49, %c0_50] : memref<18x18x16xf32, #tpu.memory_space<vmem>>, vector<8x16x16xf32>
    %117 = vector.shape_cast %11 : vector<1x16xf32> to vector<1x1x16xf32>
    %118 = vector.broadcast %117 : vector<1x1x16xf32> to vector<8x16x16xf32>
    %119 = arith.mulf %116, %118 : vector<8x16x16xf32>
    %120 = arith.addf %113, %119 : vector<8x16x16xf32>
    %c1_i32_51 = arith.constant 1 : i32
    %121 = arith.addi %94, %c1_i32_51 : i32
    %122 = arith.index_cast %121 : i32 to index
    %c1_52 = arith.constant 1 : index
    %c0_53 = arith.constant 0 : index
    %123 = vector.load %arg7[%122, %c1_52, %c0_53] : memref<18x18x16xf32, #tpu.memory_space<vmem>>, vector<8x16x16xf32>
    %124 = vector.shape_cast %12 : vector<1x16xf32> to vector<1x1x16xf32>
    %125 = vector.broadcast %124 : vector<1x1x16xf32> to vector<8x16x16xf32>
    %126 = arith.mulf %123, %125 : vector<8x16x16xf32>
    %127 = arith.addf %120, %126 : vector<8x16x16xf32>
    %c1_i32_54 = arith.constant 1 : i32
    %128 = arith.addi %94, %c1_i32_54 : i32
    %129 = arith.index_cast %128 : i32 to index
    %c2_55 = arith.constant 2 : index
    %c0_56 = arith.constant 0 : index
    %130 = vector.load %arg7[%129, %c2_55, %c0_56] : memref<18x18x16xf32, #tpu.memory_space<vmem>>, vector<8x16x16xf32>
    %131 = vector.shape_cast %13 : vector<1x16xf32> to vector<1x1x16xf32>
    %132 = vector.broadcast %131 : vector<1x1x16xf32> to vector<8x16x16xf32>
    %133 = arith.mulf %130, %132 : vector<8x16x16xf32>
    %134 = arith.addf %127, %133 : vector<8x16x16xf32>
    %c2_i32_57 = arith.constant 2 : i32
    %135 = arith.addi %94, %c2_i32_57 : i32
    %136 = arith.index_cast %135 : i32 to index
    %c0_58 = arith.constant 0 : index
    %c0_59 = arith.constant 0 : index
    %137 = vector.load %arg7[%136, %c0_58, %c0_59] : memref<18x18x16xf32, #tpu.memory_space<vmem>>, vector<8x16x16xf32>
    %138 = vector.shape_cast %14 : vector<1x16xf32> to vector<1x1x16xf32>
    %139 = vector.broadcast %138 : vector<1x1x16xf32> to vector<8x16x16xf32>
    %140 = arith.mulf %137, %139 : vector<8x16x16xf32>
    %141 = arith.addf %134, %140 : vector<8x16x16xf32>
    %c2_i32_60 = arith.constant 2 : i32
    %142 = arith.addi %94, %c2_i32_60 : i32
    %143 = arith.index_cast %142 : i32 to index
    %c1_61 = arith.constant 1 : index
    %c0_62 = arith.constant 0 : index
    %144 = vector.load %arg7[%143, %c1_61, %c0_62] : memref<18x18x16xf32, #tpu.memory_space<vmem>>, vector<8x16x16xf32>
    %145 = vector.shape_cast %15 : vector<1x16xf32> to vector<1x1x16xf32>
    %146 = vector.broadcast %145 : vector<1x1x16xf32> to vector<8x16x16xf32>
    %147 = arith.mulf %144, %146 : vector<8x16x16xf32>
    %148 = arith.addf %141, %147 : vector<8x16x16xf32>
    %c2_i32_63 = arith.constant 2 : i32
    %149 = arith.addi %94, %c2_i32_63 : i32
    %150 = arith.index_cast %149 : i32 to index
    %c2_64 = arith.constant 2 : index
    %c0_65 = arith.constant 0 : index
    %151 = vector.load %arg7[%150, %c2_64, %c0_65] : memref<18x18x16xf32, #tpu.memory_space<vmem>>, vector<8x16x16xf32>
    %152 = vector.shape_cast %16 : vector<1x16xf32> to vector<1x1x16xf32>
    %153 = vector.broadcast %152 : vector<1x1x16xf32> to vector<8x16x16xf32>
    %154 = arith.mulf %151, %153 : vector<8x16x16xf32>
    %155 = arith.addf %148, %154 : vector<8x16x16xf32>
    %156 = vector.shape_cast %155 : vector<8x16x16xf32> to vector<128x16xf32>
    %157 = arith.truncf %156 : vector<128x16xf32> to vector<128x16xbf16>
    %cst_66 = arith.constant dense<0.000000e+00> : vector<128x32xf32>
    %158 = tpu.matmul %157, %6, %cst_66 {dimension_numbers = #tpu.dot_dimension_numbers<[1], [0], [0], [1], [0, 0, 1, 1], [], []>} : vector<128x16xbf16>, vector<16x32xbf16>, vector<128x32xf32> -> vector<128x32xf32>
    %c128_i32_67 = arith.constant 128 : i32
    %159 = arith.muli %c1_i32_38, %c128_i32_67 : i32
    %160 = tpu.assume_multiple %159, 128 : i32
    %c0_68 = arith.constant 0 : index
    %161 = arith.index_cast %160 : i32 to index
    %c0_69 = arith.constant 0 : index
    %162 = vector.load %arg6[%c0_68, %161, %c0_69] : memref<1x256x32xf32, #tpu.memory_space<vmem>>, vector<1x128x32xf32>
    %163 = vector.shape_cast %162 : vector<1x128x32xf32> to vector<128x32xf32>
    %164 = arith.addf %163, %158 : vector<128x32xf32>
    %c0_70 = arith.constant 0 : index
    %165 = arith.index_cast %160 : i32 to index
    %c0_71 = arith.constant 0 : index
    %166 = vector.load %arg6[%c0_70, %165, %c0_71] : memref<1x256x32xf32, #tpu.memory_space<vmem>>, vector<1x128x32xf32>
    %167 = vector.shape_cast %166 : vector<1x128x32xf32> to vector<128x32xf32>
    %168 = vector.shape_cast %164 : vector<128x32xf32> to vector<1x128x32xf32>
    tpu.vector_store %arg6[%c0_70, %165, %c0_71], %168 {strides = array<i32>} : memref<1x256x32xf32, #tpu.memory_space<vmem>>, vector<1x128x32xf32>,
    %c2_i32_72 = arith.constant 2 : i32
    %c0_i32_73 = arith.constant 0 : i32
    %169 = arith.cmpi eq, %arg1, %c0_i32_73 : i32
    %170 = arith.extui %169 : i1 to i32
    %c0_i32_74 = arith.constant 0 : i32
    %171 = arith.cmpi ne, %170, %c0_i32_74 : i32
    scf.if %171 {
      %c0_75 = arith.constant 0 : index
      %c0_76 = arith.constant 0 : index
      %c0_77 = arith.constant 0 : index
      %172 = vector.load %arg6[%c0_75, %c0_76, %c0_77] : memref<1x256x32xf32, #tpu.memory_space<vmem>>, vector<1x256x32xf32>
      %173 = vector.shape_cast %172 : vector<1x256x32xf32> to vector<256x32xf32>
      %c0_78 = arith.constant 0 : index
      %c0_79 = arith.constant 0 : index
      %174 = vector.load %arg5[%c0_78, %c0_79] : memref<1x32xf32, #tpu.memory_space<vmem>>, vector<1x32xf32>
      %175 = vector.broadcast %174 : vector<1x32xf32> to vector<256x32xf32>
      %176 = arith.addf %173, %175 : vector<256x32xf32>
      %c0_80 = arith.constant 0 : index
      %c0_81 = arith.constant 0 : index
      %c0_82 = arith.constant 0 : index
      %177 = vector.load %arg6[%c0_80, %c0_81, %c0_82] : memref<1x256x32xf32, #tpu.memory_space<vmem>>, vector<1x256x32xf32>
      %178 = vector.shape_cast %177 : vector<1x256x32xf32> to vector<256x32xf32>
      %179 = vector.shape_cast %176 : vector<256x32xf32> to vector<1x256x32xf32>
      tpu.vector_store %arg6[%c0_80, %c0_81, %c0_82], %179 {strides = array<i32>} : memref<1x256x32xf32, #tpu.memory_space<vmem>>, vector<1x256x32xf32>,
    } else {
    }
    return
  }
  func.func @transform_0(%arg0: i32, %arg1: i32) -> (i32, i32, i32, i32) {
    %c0_i32 = arith.constant 0 : i32
    %c0_i32_0 = arith.constant 0 : i32
    %c0_i32_1 = arith.constant 0 : i32
    return %arg0, %c0_i32, %c0_i32_0, %arg1 : i32, i32, i32, i32
  }
  func.func @transform_1(%arg0: i32, %arg1: i32) -> (i32, i32) {
    %c0_i32 = arith.constant 0 : i32
    %c0_i32_0 = arith.constant 0 : i32
    return %c0_i32, %arg1 : i32, i32
  }
  func.func @transform_2(%arg0: i32, %arg1: i32) -> (i32, i32) {
    %c0_i32 = arith.constant 0 : i32
    %c0_i32_0 = arith.constant 0 : i32
    return %arg1, %c0_i32 : i32, i32
  }
  func.func @transform_3(%arg0: i32, %arg1: i32) -> (i32, i32) {
    %c0_i32 = arith.constant 0 : i32
    %c0_i32_0 = arith.constant 0 : i32
    %c0_i32_1 = arith.constant 0 : i32
    return %c0_i32, %c0_i32_0 : i32, i32
  }
  func.func @transform_4(%arg0: i32, %arg1: i32) -> (i32, i32, i32) {
    %c0_i32 = arith.constant 0 : i32
    %c0_i32_0 = arith.constant 0 : i32
    %c0_i32_1 = arith.constant 0 : i32
    return %arg0, %c0_i32, %c0_i32_0 : i32, i32, i32
  }
}

</mosaic_0001>

<llo_original>
// kernel: depthwise_separable_conv.1
$region0: #{depthwise_separable_conv.1}
  #allocation0 [shape = 'u32[]', space=smem, size = 0x4, offset = 0x4, fixed_abs, tag = 'smem constant byte address 0x4 - core index']
  #allocation1 [shape = 'u32[144,128]{1,0:T(1,128)}', space=vmem, size = 0x12000, scoped, tag = 'internal scratch']
  #allocation2 [shape = 'f32[18,18,16]{2,1,0:T(8,128)}', space=vmem, size = 0x36000, scoped, tag = 'scratch operand']
  %s0 = inlined_call_operand.vmem [shape: f32[2,16,16,16], index: 0, kind: input, shape index: {}]
  %s1 = inlined_call_operand.vmem [shape: f32[9,16], index: 1, kind: input, shape index: {}]
  %s2 = inlined_call_operand.vmem [shape: bf16[16,32], index: 2, kind: input, shape index: {}]
  %s3 = inlined_call_operand.vmem [shape: f32[1,32], index: 3, kind: input, shape index: {}]
  %s4 = inlined_call_operand.hbm [shape: f32[2,256,32], index: 4, kind: output, shape index: {}]
  %s5 = sld [smem:[#allocation0]]
  $region57: #{depthwise_separable_conv.1} parent=0
    _
  %s7 = ssub.s32 1, %s5
  %s8 = scalar_select 0, %s7, %s5
  $region1: #{depthwise_separable_conv.1} parent=0
    #allocation3 [shape = 'u8[262144]{0}', space=vmem, size = 0x40000, scoped, tag = 'output window, operand 0']
    #allocation4 [shape = 's32[2]{0}', space=sflag, size = 0x8, scoped, tag = 'scoped memory for depthwise_separable_conv.1']
    %9 = vsyncpa [#allocation4], 0
    %s10 = scalar_lea.sflag [#allocation4], 1
    %11 = vsyncpa %s10, 0
    loop: start=0, step=1, limit=4
    $region2: #{depthwise_separable_conv.1} parent=1 // loop_pre_header
      _
    $region3: #{depthwise_separable_conv.1} parent=1 // loop_header
      %s13 = sphi 0, %s17
      %p14 = scmp.ge.s32.totalorder %s13, 4
      %s20 = sphi 0, %s32
      %s21 = sphi 0, %s28
      %s22 = sphi 0, %s20
      %s23 = sphi 0, %s21
      %s24 = sphi 0, %s22
      %s25 = sphi 0, %s23
      %s37 = sphi 0, %s39
      %s40 = sphi 0, %s37
      %s41 = sphi 0, %s40
      %s57 = sphi 0, %s41
      %s63 = sphi 0, %s65
      %s66 = sphi 0, %s63
      %s67 = sphi 0, %s66
      %s83 = sphi 0, %s67
      %s89 = sphi 0, %s91
      %s92 = sphi 0, %s89
      %s93 = sphi 0, %s92
      %s109 = sphi 0, %s93
      %s113 = sphi 0, %s113
      %s115 = sphi 0, %s113
      %s116 = sphi 0, %s115
      %s130 = sphi 0, %s116
      %s136 = sphi 0, %s138
      %s139 = sphi 0, %s136
      %s140 = sphi 0, %s139
      %s156 = sphi 0, %s140
    $region4: #{depthwise_separable_conv.1} parent=1 // loop_header_branch
      %16 = sbr.rel (%p14) target = $region8
    $region5: #{depthwise_separable_conv.1} parent=1 // loop_body
      %s18 = ssub.s32 %s13, 1
      %s19 = ssub.s32 %s13, 2
      %s26 = sadd.s32 1, %s21
      %p27 = scmp.ge.s32.totalorder %s26, 1
      %s28 = scalar_select %p27, 0, %s26
      %s29 = sadd.s32 1, %s20
      %s30 = scalar_select %p27, %s29, %s20
      %p31 = scmp.ge.s32.totalorder %s30, 2
      %s32 = scalar_select %p31, 0, %s30
      %s33 = ssub.s32 %s20, %s32
      %s34 = ssub.s32 %s21, %s28
      %s35 = sor.u32 %s33, %s34
      %p36 = scmp.eq.s32.totalorder %s35, 0
      %s38 = sadd.s32 %s37, 1
      %s39 = scalar_select %p36, %s37, %s38
      %p42 = pneg %p36
      %p43 = scmp.eq.s32.totalorder %s13, 1
      %p44 = por %p42, %p43
      %p45 = scmp.ne.s32.totalorder %s37, %s40
      %p46 = scmp.eq.s32.totalorder %s13, 0
      %p47 = por %p45, %p46
      %p48 = scmp.ne.s32.totalorder %s37, %s40
      %p49 = scmp.eq.s32.totalorder %s18, 1
      %p50 = por %p48, %p49
      %p51 = scmp.ne.s32.totalorder %s40, %s41
      %p52 = scmp.eq.s32.totalorder %s18, 0
      %p53 = por %p51, %p52
      %p54 = scmp.ne.s32.totalorder %s40, %s41
      %p55 = scmp.eq.s32.totalorder %s19, 1
      %p56 = por %p54, %p55
      %p58 = scmp.ne.s32.totalorder %s41, %s57
      %p59 = scmp.eq.s32.totalorder %s19, 0
      %p60 = por %p58, %p59
      %s61 = ssub.s32 %s21, %s28
      %p62 = scmp.eq.s32.totalorder %s61, 0
      %s64 = sadd.s32 %s63, 1
      %s65 = scalar_select %p62, %s63, %s64
      %p68 = pneg %p62
      %p69 = scmp.eq.s32.totalorder %s13, 1
      %p70 = por %p68, %p69
      %p71 = scmp.ne.s32.totalorder %s63, %s66
      %p72 = scmp.eq.s32.totalorder %s13, 0
      %p73 = por %p71, %p72
      %p74 = scmp.ne.s32.totalorder %s63, %s66
      %p75 = scmp.eq.s32.totalorder %s18, 1
      %p76 = por %p74, %p75
      %p77 = scmp.ne.s32.totalorder %s66, %s67
      %p78 = scmp.eq.s32.totalorder %s18, 0
      %p79 = por %p77, %p78
      %p80 = scmp.ne.s32.totalorder %s66, %s67
      %p81 = scmp.eq.s32.totalorder %s19, 1
      %p82 = por %p80, %p81
      %p84 = scmp.ne.s32.totalorder %s67, %s83
      %p85 = scmp.eq.s32.totalorder %s19, 0
      %p86 = por %p84, %p85
      %s87 = ssub.s32 %s21, %s28
      %p88 = scmp.eq.s32.totalorder %s87, 0
      %s90 = sadd.s32 %s89, 1
      %s91 = scalar_select %p88, %s89, %s90
      %p94 = pneg %p88
      %p95 = scmp.eq.s32.totalorder %s13, 1
      %p96 = por %p94, %p95
      %p97 = scmp.ne.s32.totalorder %s89, %s92
      %p98 = scmp.eq.s32.totalorder %s13, 0
      %p99 = por %p97, %p98
      %p100 = scmp.ne.s32.totalorder %s89, %s92
      %p101 = scmp.eq.s32.totalorder %s18, 1
      %p102 = por %p100, %p101
      %p103 = scmp.ne.s32.totalorder %s92, %s93
      %p104 = scmp.eq.s32.totalorder %s18, 0
      %p105 = por %p103, %p104
      %p106 = scmp.ne.s32.totalorder %s92, %s93
      %p107 = scmp.eq.s32.totalorder %s19, 1
      %p108 = por %p106, %p107
      %p110 = scmp.ne.s32.totalorder %s93, %s109
      %p111 = scmp.eq.s32.totalorder %s19, 0
      %p112 = por %p110, %p111
      %s114 = sadd.s32 %s113, 1
      %p117 = scmp.eq.s32.totalorder %s13, 1
      %p118 = scmp.ne.s32.totalorder %s113, %s115
      %p119 = scmp.eq.s32.totalorder %s13, 0
      %p120 = por %p118, %p119
      %p121 = scmp.ne.s32.totalorder %s113, %s115
      %p122 = scmp.eq.s32.totalorder %s18, 1
      %p123 = por %p121, %p122
      %p124 = scmp.ne.s32.totalorder %s115, %s116
      %p125 = scmp.eq.s32.totalorder %s18, 0
      %p126 = por %p124, %p125
      %p127 = scmp.ne.s32.totalorder %s115, %s116
      %p128 = scmp.eq.s32.totalorder %s19, 1
      %p129 = por %p127, %p128
      %p131 = scmp.ne.s32.totalorder %s116, %s130
      %p132 = scmp.eq.s32.totalorder %s19, 0
      %p133 = por %p131, %p132
      %s134 = ssub.s32 %s20, %s32
      %p135 = scmp.eq.s32.totalorder %s134, 0
      %s137 = sadd.s32 %s136, 1
      %s138 = scalar_select %p135, %s136, %s137
      %p141 = pneg %p135
      %p142 = scmp.eq.s32.totalorder %s13, 1
      %p143 = por %p141, %p142
      %p144 = scmp.ne.s32.totalorder %s136, %s139
      %p145 = scmp.eq.s32.totalorder %s13, 0
      %p146 = por %p144, %p145
      %p147 = scmp.ne.s32.totalorder %s136, %s139
      %p148 = scmp.eq.s32.totalorder %s18, 1
      %p149 = por %p147, %p148
      %p150 = scmp.ne.s32.totalorder %s139, %s140
      %p151 = scmp.eq.s32.totalorder %s18, 0
      %p152 = por %p150, %p151
      %p153 = scmp.ne.s32.totalorder %s139, %s140
      %p154 = scmp.eq.s32.totalorder %s19, 1
      %p155 = por %p153, %p154
      %p157 = scmp.ne.s32.totalorder %s140, %s156
      %p158 = scmp.eq.s32.totalorder %s19, 0
      %p159 = por %p157, %p158
      %p160 = scmp.le.s32.totalorder 1, %s13
      %p161 = scmp.lt.s32.totalorder %s13, 3
      %p162 = pnand %p160, %p161
      %p163 = pneg %p162
      // Predicated region
      $region9: #{depthwise_separable_conv.1} parent=5 // pred_check
        _
      $region10: #{depthwise_separable_conv.1} parent=5 // pred_check_branch
        %165 = sbr.rel (%p162) target = $region12
      $region11: #{depthwise_separable_conv.1} parent=5 // pred_region
        %s166 = ssub.s32 %s13, 1
        // Predicated region
        $region13: #{depthwise_separable_conv.1} parent=11 // pred_check
          %p167 = pneg %p79
        $region14: #{depthwise_separable_conv.1} parent=11 // pred_check_branch
          %169 = sbr.rel (%p167) target = $region16
        $region15: #{depthwise_separable_conv.1} parent=11 // pred_region
          %p170 = scmp.lt.s32.totalorder %s23, 0
          %s171 = scalar_select %p170, %s23, 0
          %s172 = smul.addr %s171, 8
          %s173 = scalar_lea.vmem %s1, %s172
        $region16: #{depthwise_separable_conv.1} parent=11 // pred_fallthru
          _
        // Predicated region
        $region17: #{depthwise_separable_conv.1} parent=11 // pred_check
          %p174 = pneg %p105
        $region18: #{depthwise_separable_conv.1} parent=11 // pred_check_branch
          %176 = sbr.rel (%p174) target = $region20
        $region19: #{depthwise_separable_conv.1} parent=11 // pred_region
          %s177 = smul.u32 2, %s23
          %p178 = scmp.lt.s32.totalorder %s177, 1
          %s179 = scalar_select %p178, %s177, 1
          %s180 = smul.addr %s179, 4
          %s181 = scalar_lea.vmem %s2, %s180
          %s182 = smul.u32 2, %s23
        $region20: #{depthwise_separable_conv.1} parent=11 // pred_fallthru
          _
        // Predicated region
        $region21: #{depthwise_separable_conv.1} parent=11 // pred_check
          %p183 = pneg %p126
        $region22: #{depthwise_separable_conv.1} parent=11 // pred_check_branch
          %185 = sbr.rel (%p183) target = $region24
        $region23: #{depthwise_separable_conv.1} parent=11 // pred_region
          _
        $region24: #{depthwise_separable_conv.1} parent=11 // pred_fallthru
          _
      $region12: #{depthwise_separable_conv.1} parent=5 // pred_fallthru
        _
      %p186 = scmp.lt.s32.totalorder %s13, 2
      // Predicated region
      $region25: #{depthwise_separable_conv.1} parent=5 // pred_check
        %p187 = pneg %p186
      $region26: #{depthwise_separable_conv.1} parent=5 // pred_check_branch
        %189 = sbr.rel (%p187) target = $region28
      $region27: #{depthwise_separable_conv.1} parent=5 // pred_region
        // Predicated region
        $region29: #{depthwise_separable_conv.1} parent=27 // pred_check
          %p190 = pneg %p47
        $region30: #{depthwise_separable_conv.1} parent=27 // pred_check_branch
          %192 = sbr.rel (%p190) target = $region32
        $region31: #{depthwise_separable_conv.1} parent=27 // pred_region
          %p193 = scmp.lt.s32.totalorder %s20, 1
          %s194 = scalar_select %p193, %s20, 1
          %p195 = scmp.lt.s32.totalorder %s21, 0
          %s196 = scalar_select %p195, %s21, 0
          %s197 = smul.addr %s194, 32
          %s198 = sadd.s32 %s196, %s197
          %s199 = smul.addr %s198, 8
          %s200 = scalar_lea.vmem %s0, %s199
        $region32: #{depthwise_separable_conv.1} parent=27 // pred_fallthru
          _
      $region28: #{depthwise_separable_conv.1} parent=5 // pred_fallthru
        _
      %p201 = scmp.le.s32.totalorder 1, %s13
      %p202 = scmp.lt.s32.totalorder %s13, 3
      %p203 = pnand %p201, %p202
      %p204 = pneg %p203
      // Predicated region
      $region33: #{depthwise_separable_conv.1} parent=5 // pred_check
        _
      $region34: #{depthwise_separable_conv.1} parent=5 // pred_check_branch
        %206 = sbr.rel (%p203) target = $region36
      $region35: #{depthwise_separable_conv.1} parent=5 // pred_region
        %s207 = ssub.s32 %s13, 1
        %p208 = scmp.lt.s32.totalorder %s22, 1
        %s209 = scalar_select %p208, %s22, 1
        %p210 = scmp.lt.s32.totalorder %s23, 0
        %s211 = scalar_select %p210, %s23, 0
        %s212 = smul.addr %s209, 32
        %s213 = sadd.s32 %s211, %s212
        %s214 = smul.addr %s213, 8
        %s215 = scalar_lea.vmem %s0, %s214
        %p216 = pneg %p53
        %p217 = pneg %p50
        %p218 = scmp.lt.s32.totalorder %s23, 0
        %s219 = scalar_select %p218, %s23, 0
        %s220 = smul.addr %s219, 8
        %s221 = scalar_lea.vmem %s1, %s220
        %p222 = pneg %p79
        %p223 = pneg %p76
        %s224 = smul.u32 2, %s23
        %p225 = scmp.lt.s32.totalorder %s224, 1
        %s226 = scalar_select %p225, %s224, 1
        %s227 = smul.addr %s226, 4
        %s228 = scalar_lea.vmem %s2, %s227
        %p229 = pneg %p105
        %p230 = pneg %p102
        %p231 = pneg %p126
        %p232 = pneg %p123
        %p233 = pneg %p152
        %p234 = pneg %p149
        %s235 = sand.u32 %s139, 1
        %s236 = scalar_lea.sflag [#allocation4], %s235
        %s237 = sand.u32 %s139, 1
        %s238 = smul.addr %s237, 256
        %s239 = scalar_lea.vmem [#allocation3], %s238
        %p240 = scmp.lt.s32.totalorder %s22, 1
        %s241 = scalar_select %p240, %s22, 1
        %p242 = scmp.lt.s32.totalorder %s23, 0
        %s243 = scalar_select %p242, %s23, 0
        %s244 = smul.addr %s241, 32
        %s245 = sadd.s32 %s243, %s244
        %s246 = smul.addr %s245, 8
        %s247 = scalar_lea.vmem %s0, %s246
        %p248 = scmp.lt.s32.totalorder %s23, 0
        %s249 = scalar_select %p248, %s23, 0
        %s250 = smul.addr %s249, 8
        %s251 = scalar_lea.vmem %s1, %s250
        %s252 = smul.u32 2, %s23
        %p253 = scmp.lt.s32.totalorder %s252, 1
        %s254 = scalar_select %p253, %s252, 1
        %s255 = smul.addr %s254, 4
        %s256 = scalar_lea.vmem %s2, %s255
        %s257 = smul.u32 2, %s23
        %p259 = scmp.eq.s32.totalorder %s23, 0
        // Predicated region
        $region37: #{depthwise_separable_conv.1} parent=35 // pred_check
          %p260 = pneg %p259
        $region38: #{depthwise_separable_conv.1} parent=35 // pred_check_branch
          %262 = sbr.rel (%p260) target = $region40
        $region39: #{depthwise_separable_conv.1} parent=35 // pred_region
          %vm263 = vcmask 261120
          %264 = vst.msk [vmem:[%s239] sm:$0xff] %vm263, 0.0
          %265 = vst.msk [vmem:[%s239 + $0x8] sm:$0xff] %vm263, 0.0
          %266 = vst.msk [vmem:[%s239 + $0x10] sm:$0xff] %vm263, 0.0
          %267 = vst.msk [vmem:[%s239 + $0x18] sm:$0xff] %vm263, 0.0
          %268 = vst.msk [vmem:[%s239 + $0x20] sm:$0xff] %vm263, 0.0
          %269 = vst.msk [vmem:[%s239 + $0x28] sm:$0xff] %vm263, 0.0
          %270 = vst.msk [vmem:[%s239 + $0x30] sm:$0xff] %vm263, 0.0
          %271 = vst.msk [vmem:[%s239 + $0x38] sm:$0xff] %vm263, 0.0
          %272 = vst.msk [vmem:[%s239 + $0x40] sm:$0xff] %vm263, 0.0
          %273 = vst.msk [vmem:[%s239 + $0x48] sm:$0xff] %vm263, 0.0
          %274 = vst.msk [vmem:[%s239 + $0x50] sm:$0xff] %vm263, 0.0
          %275 = vst.msk [vmem:[%s239 + $0x58] sm:$0xff] %vm263, 0.0
          %276 = vst.msk [vmem:[%s239 + $0x60] sm:$0xff] %vm263, 0.0
          %277 = vst.msk [vmem:[%s239 + $0x68] sm:$0xff] %vm263, 0.0
          %278 = vst.msk [vmem:[%s239 + $0x70] sm:$0xff] %vm263, 0.0
          %279 = vst.msk [vmem:[%s239 + $0x78] sm:$0xff] %vm263, 0.0
          %280 = vst.msk [vmem:[%s239 + $0x80] sm:$0xff] %vm263, 0.0
          %281 = vst.msk [vmem:[%s239 + $0x88] sm:$0xff] %vm263, 0.0
          %282 = vst.msk [vmem:[%s239 + $0x90] sm:$0xff] %vm263, 0.0
          %283 = vst.msk [vmem:[%s239 + $0x98] sm:$0xff] %vm263, 0.0
          %284 = vst.msk [vmem:[%s239 + $0xa0] sm:$0xff] %vm263, 0.0
          %285 = vst.msk [vmem:[%s239 + $0xa8] sm:$0xff] %vm263, 0.0
          %286 = vst.msk [vmem:[%s239 + $0xb0] sm:$0xff] %vm263, 0.0
          %287 = vst.msk [vmem:[%s239 + $0xb8] sm:$0xff] %vm263, 0.0
          %288 = vst.msk [vmem:[%s239 + $0xc0] sm:$0xff] %vm263, 0.0
          %289 = vst.msk [vmem:[%s239 + $0xc8] sm:$0xff] %vm263, 0.0
          %290 = vst.msk [vmem:[%s239 + $0xd0] sm:$0xff] %vm263, 0.0
          %291 = vst.msk [vmem:[%s239 + $0xd8] sm:$0xff] %vm263, 0.0
          %292 = vst.msk [vmem:[%s239 + $0xe0] sm:$0xff] %vm263, 0.0
          %293 = vst.msk [vmem:[%s239 + $0xe8] sm:$0xff] %vm263, 0.0
          %294 = vst.msk [vmem:[%s239 + $0xf0] sm:$0xff] %vm263, 0.0
          %295 = vst.msk [vmem:[%s239 + $0xf8] sm:$0xff] %vm263, 0.0
          %vm296 = vcmask 130048
          %297 = vst.msk [vmem:[#allocation2] sm:$0xff] %vm296, 0.0
          %298 = vst.msk [vmem:[#allocation2 + $0x8] sm:$0xff] %vm296, 0.0
          %vm299 = vcmask 123904
          %300 = vst.msk [vmem:[#allocation2 + $0x10] sm:$0x3] %vm299, 0.0
          %301 = vst.msk [vmem:[#allocation2 + $0x18] sm:$0xff] %vm296, 0.0
          %302 = vst.msk [vmem:[#allocation2 + $0x20] sm:$0xff] %vm296, 0.0
          %303 = vst.msk [vmem:[#allocation2 + $0x28] sm:$0x3] %vm299, 0.0
          %304 = vst.msk [vmem:[#allocation2 + $0x30] sm:$0xff] %vm296, 0.0
          %305 = vst.msk [vmem:[#allocation2 + $0x38] sm:$0xff] %vm296, 0.0
          %306 = vst.msk [vmem:[#allocation2 + $0x40] sm:$0x3] %vm299, 0.0
          %307 = vst.msk [vmem:[#allocation2 + $0x48] sm:$0xff] %vm296, 0.0
          %308 = vst.msk [vmem:[#allocation2 + $0x50] sm:$0xff] %vm296, 0.0
          %309 = vst.msk [vmem:[#allocation2 + $0x58] sm:$0x3] %vm299, 0.0
          %310 = vst.msk [vmem:[#allocation2 + $0x60] sm:$0xff] %vm296, 0.0
          %311 = vst.msk [vmem:[#allocation2 + $0x68] sm:$0xff] %vm296, 0.0
          %312 = vst.msk [vmem:[#allocation2 + $0x70] sm:$0x3] %vm299, 0.0
          %313 = vst.msk [vmem:[#allocation2 + $0x78] sm:$0xff] %vm296, 0.0
          %314 = vst.msk [vmem:[#allocation2 + $0x80] sm:$0xff] %vm296, 0.0
          %315 = vst.msk [vmem:[#allocation2 + $0x88] sm:$0x3] %vm299, 0.0
          %316 = vst.msk [vmem:[#allocation2 + $0x90] sm:$0xff] %vm296, 0.0
          %317 = vst.msk [vmem:[#allocation2 + $0x98] sm:$0xff] %vm296, 0.0
          %318 = vst.msk [vmem:[#allocation2 + $0xa0] sm:$0x3] %vm299, 0.0
          %319 = vst.msk [vmem:[#allocation2 + $0xa8] sm:$0xff] %vm296, 0.0
          %320 = vst.msk [vmem:[#allocation2 + $0xb0] sm:$0xff] %vm296, 0.0
          %321 = vst.msk [vmem:[#allocation2 + $0xb8] sm:$0x3] %vm299, 0.0
          %322 = vst.msk [vmem:[#allocation2 + $0xc0] sm:$0xff] %vm296, 0.0
          %323 = vst.msk [vmem:[#allocation2 + $0xc8] sm:$0xff] %vm296, 0.0
          %324 = vst.msk [vmem:[#allocation2 + $0xd0] sm:$0x3] %vm299, 0.0
          %325 = vst.msk [vmem:[#allocation2 + $0xd8] sm:$0xff] %vm296, 0.0
          %326 = vst.msk [vmem:[#allocation2 + $0xe0] sm:$0xff] %vm296, 0.0
          %327 = vst.msk [vmem:[#allocation2 + $0xe8] sm:$0x3] %vm299, 0.0
          %328 = vst.msk [vmem:[#allocation2 + $0xf0] sm:$0xff] %vm296, 0.0
          %329 = vst.msk [vmem:[#allocation2 + $0xf8] sm:$0xff] %vm296, 0.0
          %330 = vst.msk [vmem:[#allocation2 + $0x100] sm:$0x3] %vm299, 0.0
          %331 = vst.msk [vmem:[#allocation2 + $0x108] sm:$0xff] %vm296, 0.0
          %332 = vst.msk [vmem:[#allocation2 + $0x110] sm:$0xff] %vm296, 0.0
          %333 = vst.msk [vmem:[#allocation2 + $0x118] sm:$0x3] %vm299, 0.0
          %334 = vst.msk [vmem:[#allocation2 + $0x120] sm:$0xff] %vm296, 0.0
          %335 = vst.msk [vmem:[#allocation2 + $0x128] sm:$0xff] %vm296, 0.0
          %336 = vst.msk [vmem:[#allocation2 + $0x130] sm:$0x3] %vm299, 0.0
          %337 = vst.msk [vmem:[#allocation2 + $0x138] sm:$0xff] %vm296, 0.0
          %338 = vst.msk [vmem:[#allocation2 + $0x140] sm:$0xff] %vm296, 0.0
          %339 = vst.msk [vmem:[#allocation2 + $0x148] sm:$0x3] %vm299, 0.0
          %340 = vst.msk [vmem:[#allocation2 + $0x150] sm:$0xff] %vm296, 0.0
          %341 = vst.msk [vmem:[#allocation2 + $0x158] sm:$0xff] %vm296, 0.0
          %342 = vst.msk [vmem:[#allocation2 + $0x160] sm:$0x3] %vm299, 0.0
          %343 = vst.msk [vmem:[#allocation2 + $0x168] sm:$0xff] %vm296, 0.0
          %344 = vst.msk [vmem:[#allocation2 + $0x170] sm:$0xff] %vm296, 0.0
          %345 = vst.msk [vmem:[#allocation2 + $0x178] sm:$0x3] %vm299, 0.0
          %346 = vst.msk [vmem:[#allocation2 + $0x180] sm:$0xff] %vm296, 0.0
          %347 = vst.msk [vmem:[#allocation2 + $0x188] sm:$0xff] %vm296, 0.0
          %348 = vst.msk [vmem:[#allocation2 + $0x190] sm:$0x3] %vm299, 0.0
          %349 = vst.msk [vmem:[#allocation2 + $0x198] sm:$0xff] %vm296, 0.0
          %350 = vst.msk [vmem:[#allocation2 + $0x1a0] sm:$0xff] %vm296, 0.0
          %351 = vst.msk [vmem:[#allocation2 + $0x1a8] sm:$0x3] %vm299, 0.0
        $region40: #{depthwise_separable_conv.1} parent=35 // pred_fallthru
          _
        %v352 = vld [vmem:[%s247] sm:$0xff]
        %v353 = vld [vmem:[%s247 + $0x8] sm:$0xff]
        %v354 = vld [vmem:[%s247 + $0x10] sm:$0xff]
        %v355 = vld [vmem:[%s247 + $0x18] sm:$0xff]
        %v356 = vld [vmem:[%s247 + $0x20] sm:$0xff]
        %v357 = vld [vmem:[%s247 + $0x28] sm:$0xff]
        %v358 = vld [vmem:[%s247 + $0x30] sm:$0xff]
        %v359 = vld [vmem:[%s247 + $0x38] sm:$0xff]
        %v360 = vld [vmem:[%s247 + $0x40] sm:$0xff]
        %v361 = vld [vmem:[%s247 + $0x48] sm:$0xff]
        %v362 = vld [vmem:[%s247 + $0x50] sm:$0xff]
        %v363 = vld [vmem:[%s247 + $0x58] sm:$0xff]
        %v364 = vld [vmem:[%s247 + $0x60] sm:$0xff]
        %v365 = vld [vmem:[%s247 + $0x68] sm:$0xff]
        %v366 = vld [vmem:[%s247 + $0x70] sm:$0xff]
        %v367 = vld [vmem:[%s247 + $0x78] sm:$0xff]
        %v368 = vld [vmem:[%s247 + $0x80] sm:$0xff]
        %v369 = vld [vmem:[%s247 + $0x88] sm:$0xff]
        %v370 = vld [vmem:[%s247 + $0x90] sm:$0xff]
        %v371 = vld [vmem:[%s247 + $0x98] sm:$0xff]
        %v372 = vld [vmem:[%s247 + $0xa0] sm:$0xff]
        %v373 = vld [vmem:[%s247 + $0xa8] sm:$0xff]
        %v374 = vld [vmem:[%s247 + $0xb0] sm:$0xff]
        %v375 = vld [vmem:[%s247 + $0xb8] sm:$0xff]
        %v376 = vld [vmem:[%s247 + $0xc0] sm:$0xff]
        %v377 = vld [vmem:[%s247 + $0xc8] sm:$0xff]
        %v378 = vld [vmem:[%s247 + $0xd0] sm:$0xff]
        %v379 = vld [vmem:[%s247 + $0xd8] sm:$0xff]
        %v380 = vld [vmem:[%s247 + $0xe0] sm:$0xff]
        %v381 = vld [vmem:[%s247 + $0xe8] sm:$0xff]
        %v382 = vld [vmem:[%s247 + $0xf0] sm:$0xff]
        %v383 = vld [vmem:[%s247 + $0xf8] sm:$0xff]
        %s384 = scalar_lea.vmem [#allocation2], 24
        %vm385 = vcmask 130048
        %386 = vst.msk [vmem:[%s384 + $0x1] sm:$0xff] %vm385, %v352
        %387 = vst.msk [vmem:[%s384 + $0x9] sm:$0xff] %vm385, %v353
        %388 = vst.msk [vmem:[%s384 + $0x19] sm:$0xff] %vm385, %v354
        %389 = vst.msk [vmem:[%s384 + $0x21] sm:$0xff] %vm385, %v355
        %390 = vst.msk [vmem:[%s384 + $0x31] sm:$0xff] %vm385, %v356
        %391 = vst.msk [vmem:[%s384 + $0x39] sm:$0xff] %vm385, %v357
        %392 = vst.msk [vmem:[%s384 + $0x49] sm:$0xff] %vm385, %v358
        %393 = vst.msk [vmem:[%s384 + $0x51] sm:$0xff] %vm385, %v359
        %394 = vst.msk [vmem:[%s384 + $0x61] sm:$0xff] %vm385, %v360
        %395 = vst.msk [vmem:[%s384 + $0x69] sm:$0xff] %vm385, %v361
        %396 = vst.msk [vmem:[%s384 + $0x79] sm:$0xff] %vm385, %v362
        %397 = vst.msk [vmem:[%s384 + $0x81] sm:$0xff] %vm385, %v363
        %398 = vst.msk [vmem:[%s384 + $0x91] sm:$0xff] %vm385, %v364
        %399 = vst.msk [vmem:[%s384 + $0x99] sm:$0xff] %vm385, %v365
        %400 = vst.msk [vmem:[%s384 + $0xa9] sm:$0xff] %vm385, %v366
        %401 = vst.msk [vmem:[%s384 + $0xb1] sm:$0xff] %vm385, %v367
        %402 = vst.msk [vmem:[%s384 + $0xc1] sm:$0xff] %vm385, %v368
        %403 = vst.msk [vmem:[%s384 + $0xc9] sm:$0xff] %vm385, %v369
        %404 = vst.msk [vmem:[%s384 + $0xd9] sm:$0xff] %vm385, %v370
        %405 = vst.msk [vmem:[%s384 + $0xe1] sm:$0xff] %vm385, %v371
        %406 = vst.msk [vmem:[%s384 + $0xf1] sm:$0xff] %vm385, %v372
        %407 = vst.msk [vmem:[%s384 + $0xf9] sm:$0xff] %vm385, %v373
        %408 = vst.msk [vmem:[%s384 + $0x109] sm:$0xff] %vm385, %v374
        %409 = vst.msk [vmem:[%s384 + $0x111] sm:$0xff] %vm385, %v375
        %410 = vst.msk [vmem:[%s384 + $0x121] sm:$0xff] %vm385, %v376
        %411 = vst.msk [vmem:[%s384 + $0x129] sm:$0xff] %vm385, %v377
        %412 = vst.msk [vmem:[%s384 + $0x139] sm:$0xff] %vm385, %v378
        %413 = vst.msk [vmem:[%s384 + $0x141] sm:$0xff] %vm385, %v379
        %414 = vst.msk [vmem:[%s384 + $0x151] sm:$0xff] %vm385, %v380
        %415 = vst.msk [vmem:[%s384 + $0x159] sm:$0xff] %vm385, %v381
        %416 = vst.msk [vmem:[%s384 + $0x169] sm:$0xff] %vm385, %v382
        %417 = vst.msk [vmem:[%s384 + $0x171] sm:$0xff] %vm385, %v383
        %v418 = vld [vmem:[%s256] sm:$0xf]
        %v419 = vld [vmem:[%s256 + $0x4] sm:$0xf]
        %v420 = vld [vmem:[%s251] sm:$0xff]
        %v421 = vld [vmem:[%s251 + $0x8] sm:$0x1]
        %s422 = smul.u32 0, 24
        %s423 = scalar_lea.vmem [#allocation2], %s422
        %v424 = vld [vmem:[%s423] sm:$0xff]
        %v425 = vld [vmem:[%s423 + $0x8] sm:$0xff]
        %v426 = vld [vmem:[%s423 + $0x18] sm:$0xff]
        %v427 = vld [vmem:[%s423 + $0x20] sm:$0xff]
        %v428 = vld [vmem:[%s423 + $0x30] sm:$0xff]
        %v429 = vld [vmem:[%s423 + $0x38] sm:$0xff]
        %v430 = vld [vmem:[%s423 + $0x48] sm:$0xff]
        %v431 = vld [vmem:[%s423 + $0x50] sm:$0xff]
        %v432 = vld [vmem:[%s423 + $0x60] sm:$0xff]
        %v433 = vld [vmem:[%s423 + $0x68] sm:$0xff]
        %v434 = vld [vmem:[%s423 + $0x78] sm:$0xff]
        %v435 = vld [vmem:[%s423 + $0x80] sm:$0xff]
        %v436 = vld [vmem:[%s423 + $0x90] sm:$0xff]
        %v437 = vld [vmem:[%s423 + $0x98] sm:$0xff]
        %v438 = vld [vmem:[%s423 + $0xa8] sm:$0xff]
        %v439 = vld [vmem:[%s423 + $0xb0] sm:$0xff]
        %v440 = vlaneseq
        %v441 = vshrl.u32 %v440, 7
        %v442 = vsub.s32 0, %v441
        %v443 = vrot.slane %v420, %v442
        %v444 = vmul.f32 %v424, %v443
        %v445 = vmul.f32 %v425, %v443
        %v446 = vmul.f32 %v426, %v443
        %v447 = vmul.f32 %v427, %v443
        %v448 = vmul.f32 %v428, %v443
        %v449 = vmul.f32 %v429, %v443
        %v450 = vmul.f32 %v430, %v443
        %v451 = vmul.f32 %v431, %v443
        %v452 = vmul.f32 %v432, %v443
        %v453 = vmul.f32 %v433, %v443
        %v454 = vmul.f32 %v434, %v443
        %v455 = vmul.f32 %v435, %v443
        %v456 = vmul.f32 %v436, %v443
        %v457 = vmul.f32 %v437, %v443
        %v458 = vmul.f32 %v438, %v443
        %v459 = vmul.f32 %v439, %v443
        %v460 = vld [vmem:[%s423 + $0x1] sm:$0xff]
        %v461 = vld [vmem:[%s423 + $0x9] sm:$0xff]
        %v462 = vld [vmem:[%s423 + $0x19] sm:$0xff]
        %v463 = vld [vmem:[%s423 + $0x21] sm:$0xff]
        %v464 = vld [vmem:[%s423 + $0x31] sm:$0xff]
        %v465 = vld [vmem:[%s423 + $0x39] sm:$0xff]
        %v466 = vld [vmem:[%s423 + $0x49] sm:$0xff]
        %v467 = vld [vmem:[%s423 + $0x51] sm:$0xff]
        %v468 = vld [vmem:[%s423 + $0x61] sm:$0xff]
        %v469 = vld [vmem:[%s423 + $0x69] sm:$0xff]
        %v470 = vld [vmem:[%s423 + $0x79] sm:$0xff]
        %v471 = vld [vmem:[%s423 + $0x81] sm:$0xff]
        %v472 = vld [vmem:[%s423 + $0x91] sm:$0xff]
        %v473 = vld [vmem:[%s423 + $0x99] sm:$0xff]
        %v474 = vld [vmem:[%s423 + $0xa9] sm:$0xff]
        %v475 = vld [vmem:[%s423 + $0xb1] sm:$0xff]
        %v476 = vlaneseq
        %v477 = vshrl.u32 %v476, 7
        %v478 = vsub.s32 1, %v477
        %v479 = vrot.slane %v420, %v478
        %v480 = vmul.f32 %v460, %v479
        %v481 = vmul.f32 %v461, %v479
        %v482 = vmul.f32 %v462, %v479
        %v483 = vmul.f32 %v463, %v479
        %v484 = vmul.f32 %v464, %v479
        %v485 = vmul.f32 %v465, %v479
        %v486 = vmul.f32 %v466, %v479
        %v487 = vmul.f32 %v467, %v479
        %v488 = vmul.f32 %v468, %v479
        %v489 = vmul.f32 %v469, %v479
        %v490 = vmul.f32 %v470, %v479
        %v491 = vmul.f32 %v471, %v479
        %v492 = vmul.f32 %v472, %v479
        %v493 = vmul.f32 %v473, %v479
        %v494 = vmul.f32 %v474, %v479
        %v495 = vmul.f32 %v475, %v479
        %v496 = vadd.f32 %v444, %v480
        %v497 = vadd.f32 %v445, %v481
        %v498 = vadd.f32 %v446, %v482
        %v499 = vadd.f32 %v447, %v483
        %v500 = vadd.f32 %v448, %v484
        %v501 = vadd.f32 %v449, %v485
        %v502 = vadd.f32 %v450, %v486
        %v503 = vadd.f32 %v451, %v487
        %v504 = vadd.f32 %v452, %v488
        %v505 = vadd.f32 %v453, %v489
        %v506 = vadd.f32 %v454, %v490
        %v507 = vadd.f32 %v455, %v491
        %v508 = vadd.f32 %v456, %v492
        %v509 = vadd.f32 %v457, %v493
        %v510 = vadd.f32 %v458, %v494
        %v511 = vadd.f32 %v459, %v495
        %v512 = vld [vmem:[%s423 + $0x2] sm:$0xff]
        %v513 = vld [vmem:[%s423 + $0xa] sm:$0xff]
        %v514 = vld [vmem:[%s423 + $0x1a] sm:$0xff]
        %v515 = vld [vmem:[%s423 + $0x22] sm:$0xff]
        %v516 = vld [vmem:[%s423 + $0x32] sm:$0xff]
        %v517 = vld [vmem:[%s423 + $0x3a] sm:$0xff]
        %v518 = vld [vmem:[%s423 + $0x4a] sm:$0xff]
        %v519 = vld [vmem:[%s423 + $0x52] sm:$0xff]
        %v520 = vld [vmem:[%s423 + $0x62] sm:$0xff]
        %v521 = vld [vmem:[%s423 + $0x6a] sm:$0xff]
        %v522 = vld [vmem:[%s423 + $0x7a] sm:$0xff]
        %v523 = vld [vmem:[%s423 + $0x82] sm:$0xff]
        %v524 = vld [vmem:[%s423 + $0x92] sm:$0xff]
        %v525 = vld [vmem:[%s423 + $0x9a] sm:$0xff]
        %v526 = vld [vmem:[%s423 + $0xaa] sm:$0xff]
        %v527 = vld [vmem:[%s423 + $0xb2] sm:$0xff]
        %v528 = vlaneseq
        %v529 = vshrl.u32 %v528, 7
        %v530 = vsub.s32 2, %v529
        %v531 = vrot.slane %v420, %v530
        %v532 = vmul.f32 %v512, %v531
        %v533 = vmul.f32 %v513, %v531
        %v534 = vmul.f32 %v514, %v531
        %v535 = vmul.f32 %v515, %v531
        %v536 = vmul.f32 %v516, %v531
        %v537 = vmul.f32 %v517, %v531
        %v538 = vmul.f32 %v518, %v531
        %v539 = vmul.f32 %v519, %v531
        %v540 = vmul.f32 %v520, %v531
        %v541 = vmul.f32 %v521, %v531
        %v542 = vmul.f32 %v522, %v531
        %v543 = vmul.f32 %v523, %v531
        %v544 = vmul.f32 %v524, %v531
        %v545 = vmul.f32 %v525, %v531
        %v546 = vmul.f32 %v526, %v531
        %v547 = vmul.f32 %v527, %v531
        %v548 = vadd.f32 %v496, %v532
        %v549 = vadd.f32 %v497, %v533
        %v550 = vadd.f32 %v498, %v534
        %v551 = vadd.f32 %v499, %v535
        %v552 = vadd.f32 %v500, %v536
        %v553 = vadd.f32 %v501, %v537
        %v554 = vadd.f32 %v502, %v538
        %v555 = vadd.f32 %v503, %v539
        %v556 = vadd.f32 %v504, %v540
        %v557 = vadd.f32 %v505, %v541
        %v558 = vadd.f32 %v506, %v542
        %v559 = vadd.f32 %v507, %v543
        %v560 = vadd.f32 %v508, %v544
        %v561 = vadd.f32 %v509, %v545
        %v562 = vadd.f32 %v510, %v546
        %v563 = vadd.f32 %v511, %v547
        %s564 = sadd.s32 0, 1
        %s565 = smul.u32 %s564, 24
        %s566 = scalar_lea.vmem [#allocation2], %s565
        %v567 = vld [vmem:[%s566] sm:$0xff]
        %v568 = vld [vmem:[%s566 + $0x8] sm:$0xff]
        %v569 = vld [vmem:[%s566 + $0x18] sm:$0xff]
        %v570 = vld [vmem:[%s566 + $0x20] sm:$0xff]
        %v571 = vld [vmem:[%s566 + $0x30] sm:$0xff]
        %v572 = vld [vmem:[%s566 + $0x38] sm:$0xff]
        %v573 = vld [vmem:[%s566 + $0x48] sm:$0xff]
        %v574 = vld [vmem:[%s566 + $0x50] sm:$0xff]
        %v575 = vld [vmem:[%s566 + $0x60] sm:$0xff]
        %v576 = vld [vmem:[%s566 + $0x68] sm:$0xff]
        %v577 = vld [vmem:[%s566 + $0x78] sm:$0xff]
        %v578 = vld [vmem:[%s566 + $0x80] sm:$0xff]
        %v579 = vld [vmem:[%s566 + $0x90] sm:$0xff]
        %v580 = vld [vmem:[%s566 + $0x98] sm:$0xff]
        %v581 = vld [vmem:[%s566 + $0xa8] sm:$0xff]
        %v582 = vld [vmem:[%s566 + $0xb0] sm:$0xff]
        %v583 = vlaneseq
        %v584 = vshrl.u32 %v583, 7
        %v585 = vsub.s32 3, %v584
        %v586 = vrot.slane %v420, %v585
        %v587 = vmul.f32 %v567, %v586
        %v588 = vmul.f32 %v568, %v586
        %v589 = vmul.f32 %v569, %v586
        %v590 = vmul.f32 %v570, %v586
        %v591 = vmul.f32 %v571, %v586
        %v592 = vmul.f32 %v572, %v586
        %v593 = vmul.f32 %v573, %v586
        %v594 = vmul.f32 %v574, %v586
        %v595 = vmul.f32 %v575, %v586
        %v596 = vmul.f32 %v576, %v586
        %v597 = vmul.f32 %v577, %v586
        %v598 = vmul.f32 %v578, %v586
        %v599 = vmul.f32 %v579, %v586
        %v600 = vmul.f32 %v580, %v586
        %v601 = vmul.f32 %v581, %v586
        %v602 = vmul.f32 %v582, %v586
        %v603 = vadd.f32 %v548, %v587
        %v604 = vadd.f32 %v549, %v588
        %v605 = vadd.f32 %v550, %v589
        %v606 = vadd.f32 %v551, %v590
        %v607 = vadd.f32 %v552, %v591
        %v608 = vadd.f32 %v553, %v592
        %v609 = vadd.f32 %v554, %v593
        %v610 = vadd.f32 %v555, %v594
        %v611 = vadd.f32 %v556, %v595
        %v612 = vadd.f32 %v557, %v596
        %v613 = vadd.f32 %v558, %v597
        %v614 = vadd.f32 %v559, %v598
        %v615 = vadd.f32 %v560, %v599
        %v616 = vadd.f32 %v561, %v600
        %v617 = vadd.f32 %v562, %v601
        %v618 = vadd.f32 %v563, %v602
        %v619 = vld [vmem:[%s566 + $0x1] sm:$0xff]
        %v620 = vld [vmem:[%s566 + $0x9] sm:$0xff]
        %v621 = vld [vmem:[%s566 + $0x19] sm:$0xff]
        %v622 = vld [vmem:[%s566 + $0x21] sm:$0xff]
        %v623 = vld [vmem:[%s566 + $0x31] sm:$0xff]
        %v624 = vld [vmem:[%s566 + $0x39] sm:$0xff]
        %v625 = vld [vmem:[%s566 + $0x49] sm:$0xff]
        %v626 = vld [vmem:[%s566 + $0x51] sm:$0xff]
        %v627 = vld [vmem:[%s566 + $0x61] sm:$0xff]
        %v628 = vld [vmem:[%s566 + $0x69] sm:$0xff]
        %v629 = vld [vmem:[%s566 + $0x79] sm:$0xff]
        %v630 = vld [vmem:[%s566 + $0x81] sm:$0xff]
        %v631 = vld [vmem:[%s566 + $0x91] sm:$0xff]
        %v632 = vld [vmem:[%s566 + $0x99] sm:$0xff]
        %v633 = vld [vmem:[%s566 + $0xa9] sm:$0xff]
        %v634 = vld [vmem:[%s566 + $0xb1] sm:$0xff]
        %v635 = vlaneseq
        %v636 = vshrl.u32 %v635, 7
        %v637 = vsub.s32 4, %v636
        %v638 = vrot.slane %v420, %v637
        %v639 = vmul.f32 %v619, %v638
        %v640 = vmul.f32 %v620, %v638
        %v641 = vmul.f32 %v621, %v638
        %v642 = vmul.f32 %v622, %v638
        %v643 = vmul.f32 %v623, %v638
        %v644 = vmul.f32 %v624, %v638
        %v645 = vmul.f32 %v625, %v638
        %v646 = vmul.f32 %v626, %v638
        %v647 = vmul.f32 %v627, %v638
        %v648 = vmul.f32 %v628, %v638
        %v649 = vmul.f32 %v629, %v638
        %v650 = vmul.f32 %v630, %v638
        %v651 = vmul.f32 %v631, %v638
        %v652 = vmul.f32 %v632, %v638
        %v653 = vmul.f32 %v633, %v638
        %v654 = vmul.f32 %v634, %v638
        %v655 = vadd.f32 %v603, %v639
        %v656 = vadd.f32 %v604, %v640
        %v657 = vadd.f32 %v605, %v641
        %v658 = vadd.f32 %v606, %v642
        %v659 = vadd.f32 %v607, %v643
        %v660 = vadd.f32 %v608, %v644
        %v661 = vadd.f32 %v609, %v645
        %v662 = vadd.f32 %v610, %v646
        %v663 = vadd.f32 %v611, %v647
        %v664 = vadd.f32 %v612, %v648
        %v665 = vadd.f32 %v613, %v649
        %v666 = vadd.f32 %v614, %v650
        %v667 = vadd.f32 %v615, %v651
        %v668 = vadd.f32 %v616, %v652
        %v669 = vadd.f32 %v617, %v653
        %v670 = vadd.f32 %v618, %v654
        %v671 = vld [vmem:[%s566 + $0x2] sm:$0xff]
        %v672 = vld [vmem:[%s566 + $0xa] sm:$0xff]
        %v673 = vld [vmem:[%s566 + $0x1a] sm:$0xff]
        %v674 = vld [vmem:[%s566 + $0x22] sm:$0xff]
        %v675 = vld [vmem:[%s566 + $0x32] sm:$0xff]
        %v676 = vld [vmem:[%s566 + $0x3a] sm:$0xff]
        %v677 = vld [vmem:[%s566 + $0x4a] sm:$0xff]
        %v678 = vld [vmem:[%s566 + $0x52] sm:$0xff]
        %v679 = vld [vmem:[%s566 + $0x62] sm:$0xff]
        %v680 = vld [vmem:[%s566 + $0x6a] sm:$0xff]
        %v681 = vld [vmem:[%s566 + $0x7a] sm:$0xff]
        %v682 = vld [vmem:[%s566 + $0x82] sm:$0xff]
        %v683 = vld [vmem:[%s566 + $0x92] sm:$0xff]
        %v684 = vld [vmem:[%s566 + $0x9a] sm:$0xff]
        %v685 = vld [vmem:[%s566 + $0xaa] sm:$0xff]
        %v686 = vld [vmem:[%s566 + $0xb2] sm:$0xff]
        %v687 = vlaneseq
        %v688 = vshrl.u32 %v687, 7
        %v689 = vsub.s32 5, %v688
        %v690 = vrot.slane %v420, %v689
        %v691 = vmul.f32 %v671, %v690
        %v692 = vmul.f32 %v672, %v690
        %v693 = vmul.f32 %v673, %v690
        %v694 = vmul.f32 %v674, %v690
        %v695 = vmul.f32 %v675, %v690
        %v696 = vmul.f32 %v676, %v690
        %v697 = vmul.f32 %v677, %v690
        %v698 = vmul.f32 %v678, %v690
        %v699 = vmul.f32 %v679, %v690
        %v700 = vmul.f32 %v680, %v690
        %v701 = vmul.f32 %v681, %v690
        %v702 = vmul.f32 %v682, %v690
        %v703 = vmul.f32 %v683, %v690
        %v704 = vmul.f32 %v684, %v690
        %v705 = vmul.f32 %v685, %v690
        %v706 = vmul.f32 %v686, %v690
        %v707 = vadd.f32 %v655, %v691
        %v708 = vadd.f32 %v656, %v692
        %v709 = vadd.f32 %v657, %v693
        %v710 = vadd.f32 %v658, %v694
        %v711 = vadd.f32 %v659, %v695
        %v712 = vadd.f32 %v660, %v696
        %v713 = vadd.f32 %v661, %v697
        %v714 = vadd.f32 %v662, %v698
        %v715 = vadd.f32 %v663, %v699
        %v716 = vadd.f32 %v664, %v700
        %v717 = vadd.f32 %v665, %v701
        %v718 = vadd.f32 %v666, %v702
        %v719 = vadd.f32 %v667, %v703
        %v720 = vadd.f32 %v668, %v704
        %v721 = vadd.f32 %v669, %v705
        %v722 = vadd.f32 %v670, %v706
        %s723 = sadd.s32 0, 2
        %s724 = smul.u32 %s723, 24
        %s725 = scalar_lea.vmem [#allocation2], %s724
        %v726 = vld [vmem:[%s725] sm:$0xff]
        %v727 = vld [vmem:[%s725 + $0x8] sm:$0xff]
        %v728 = vld [vmem:[%s725 + $0x18] sm:$0xff]
        %v729 = vld [vmem:[%s725 + $0x20] sm:$0xff]
        %v730 = vld [vmem:[%s725 + $0x30] sm:$0xff]
        %v731 = vld [vmem:[%s725 + $0x38] sm:$0xff]
        %v732 = vld [vmem:[%s725 + $0x48] sm:$0xff]
        %v733 = vld [vmem:[%s725 + $0x50] sm:$0xff]
        %v734 = vld [vmem:[%s725 + $0x60] sm:$0xff]
        %v735 = vld [vmem:[%s725 + $0x68] sm:$0xff]
        %v736 = vld [vmem:[%s725 + $0x78] sm:$0xff]
        %v737 = vld [vmem:[%s725 + $0x80] sm:$0xff]
        %v738 = vld [vmem:[%s725 + $0x90] sm:$0xff]
        %v739 = vld [vmem:[%s725 + $0x98] sm:$0xff]
        %v740 = vld [vmem:[%s725 + $0xa8] sm:$0xff]
        %v741 = vld [vmem:[%s725 + $0xb0] sm:$0xff]
        %v742 = vlaneseq
        %v743 = vshrl.u32 %v742, 7
        %v744 = vsub.s32 6, %v743
        %v745 = vrot.slane %v420, %v744
        %v746 = vmul.f32 %v726, %v745
        %v747 = vmul.f32 %v727, %v745
        %v748 = vmul.f32 %v728, %v745
        %v749 = vmul.f32 %v729, %v745
        %v750 = vmul.f32 %v730, %v745
        %v751 = vmul.f32 %v731, %v745
        %v752 = vmul.f32 %v732, %v745
        %v753 = vmul.f32 %v733, %v745
        %v754 = vmul.f32 %v734, %v745
        %v755 = vmul.f32 %v735, %v745
        %v756 = vmul.f32 %v736, %v745
        %v757 = vmul.f32 %v737, %v745
        %v758 = vmul.f32 %v738, %v745
        %v759 = vmul.f32 %v739, %v745
        %v760 = vmul.f32 %v740, %v745
        %v761 = vmul.f32 %v741, %v745
        %v762 = vadd.f32 %v707, %v746
        %v763 = vadd.f32 %v708, %v747
        %v764 = vadd.f32 %v709, %v748
        %v765 = vadd.f32 %v710, %v749
        %v766 = vadd.f32 %v711, %v750
        %v767 = vadd.f32 %v712, %v751
        %v768 = vadd.f32 %v713, %v752
        %v769 = vadd.f32 %v714, %v753
        %v770 = vadd.f32 %v715, %v754
        %v771 = vadd.f32 %v716, %v755
        %v772 = vadd.f32 %v717, %v756
        %v773 = vadd.f32 %v718, %v757
        %v774 = vadd.f32 %v719, %v758
        %v775 = vadd.f32 %v720, %v759
        %v776 = vadd.f32 %v721, %v760
        %v777 = vadd.f32 %v722, %v761
        %v778 = vld [vmem:[%s725 + $0x1] sm:$0xff]
        %v779 = vld [vmem:[%s725 + $0x9] sm:$0xff]
        %v780 = vld [vmem:[%s725 + $0x19] sm:$0xff]
        %v781 = vld [vmem:[%s725 + $0x21] sm:$0xff]
        %v782 = vld [vmem:[%s725 + $0x31] sm:$0xff]
        %v783 = vld [vmem:[%s725 + $0x39] sm:$0xff]
        %v784 = vld [vmem:[%s725 + $0x49] sm:$0xff]
        %v785 = vld [vmem:[%s725 + $0x51] sm:$0xff]
        %v786 = vld [vmem:[%s725 + $0x61] sm:$0xff]
        %v787 = vld [vmem:[%s725 + $0x69] sm:$0xff]
        %v788 = vld [vmem:[%s725 + $0x79] sm:$0xff]
        %v789 = vld [vmem:[%s725 + $0x81] sm:$0xff]
        %v790 = vld [vmem:[%s725 + $0x91] sm:$0xff]
        %v791 = vld [vmem:[%s725 + $0x99] sm:$0xff]
        %v792 = vld [vmem:[%s725 + $0xa9] sm:$0xff]
        %v793 = vld [vmem:[%s725 + $0xb1] sm:$0xff]
        %v794 = vlaneseq
        %v795 = vshrl.u32 %v794, 7
        %v796 = vsub.s32 7, %v795
        %v797 = vrot.slane %v420, %v796
        %v798 = vmul.f32 %v778, %v797
        %v799 = vmul.f32 %v779, %v797
        %v800 = vmul.f32 %v780, %v797
        %v801 = vmul.f32 %v781, %v797
        %v802 = vmul.f32 %v782, %v797
        %v803 = vmul.f32 %v783, %v797
        %v804 = vmul.f32 %v784, %v797
        %v805 = vmul.f32 %v785, %v797
        %v806 = vmul.f32 %v786, %v797
        %v807 = vmul.f32 %v787, %v797
        %v808 = vmul.f32 %v788, %v797
        %v809 = vmul.f32 %v789, %v797
        %v810 = vmul.f32 %v790, %v797
        %v811 = vmul.f32 %v791, %v797
        %v812 = vmul.f32 %v792, %v797
        %v813 = vmul.f32 %v793, %v797
        %v814 = vadd.f32 %v762, %v798
        %v815 = vadd.f32 %v763, %v799
        %v816 = vadd.f32 %v764, %v800
        %v817 = vadd.f32 %v765, %v801
        %v818 = vadd.f32 %v766, %v802
        %v819 = vadd.f32 %v767, %v803
        %v820 = vadd.f32 %v768, %v804
        %v821 = vadd.f32 %v769, %v805
        %v822 = vadd.f32 %v770, %v806
        %v823 = vadd.f32 %v771, %v807
        %v824 = vadd.f32 %v772, %v808
        %v825 = vadd.f32 %v773, %v809
        %v826 = vadd.f32 %v774, %v810
        %v827 = vadd.f32 %v775, %v811
        %v828 = vadd.f32 %v776, %v812
        %v829 = vadd.f32 %v777, %v813
        %v830 = vld [vmem:[%s725 + $0x2] sm:$0xff]
        %v831 = vld [vmem:[%s725 + $0xa] sm:$0xff]
        %v832 = vld [vmem:[%s725 + $0x1a] sm:$0xff]
        %v833 = vld [vmem:[%s725 + $0x22] sm:$0xff]
        %v834 = vld [vmem:[%s725 + $0x32] sm:$0xff]
        %v835 = vld [vmem:[%s725 + $0x3a] sm:$0xff]
        %v836 = vld [vmem:[%s725 + $0x4a] sm:$0xff]
        %v837 = vld [vmem:[%s725 + $0x52] sm:$0xff]
        %v838 = vld [vmem:[%s725 + $0x62] sm:$0xff]
        %v839 = vld [vmem:[%s725 + $0x6a] sm:$0xff]
        %v840 = vld [vmem:[%s725 + $0x7a] sm:$0xff]
        %v841 = vld [vmem:[%s725 + $0x82] sm:$0xff]
        %v842 = vld [vmem:[%s725 + $0x92] sm:$0xff]
        %v843 = vld [vmem:[%s725 + $0x9a] sm:$0xff]
        %v844 = vld [vmem:[%s725 + $0xaa] sm:$0xff]
        %v845 = vld [vmem:[%s725 + $0xb2] sm:$0xff]
        %v846 = vlaneseq
        %v847 = vshrl.u32 %v846, 7
        %v848 = vsub.s32 0, %v847
        %v849 = vrot.slane %v421, %v848
        %v850 = vmul.f32 %v830, %v849
        %v851 = vmul.f32 %v831, %v849
        %v852 = vmul.f32 %v832, %v849
        %v853 = vmul.f32 %v833, %v849
        %v854 = vmul.f32 %v834, %v849
        %v855 = vmul.f32 %v835, %v849
        %v856 = vmul.f32 %v836, %v849
        %v857 = vmul.f32 %v837, %v849
        %v858 = vmul.f32 %v838, %v849
        %v859 = vmul.f32 %v839, %v849
        %v860 = vmul.f32 %v840, %v849
        %v861 = vmul.f32 %v841, %v849
        %v862 = vmul.f32 %v842, %v849
        %v863 = vmul.f32 %v843, %v849
        %v864 = vmul.f32 %v844, %v849
        %v865 = vmul.f32 %v845, %v849
        %v866 = vadd.f32 %v814, %v850
        %v867 = vadd.f32 %v815, %v851
        %v868 = vadd.f32 %v816, %v852
        %v869 = vadd.f32 %v817, %v853
        %v870 = vadd.f32 %v818, %v854
        %v871 = vadd.f32 %v819, %v855
        %v872 = vadd.f32 %v820, %v856
        %v873 = vadd.f32 %v821, %v857
        %v874 = vadd.f32 %v822, %v858
        %v875 = vadd.f32 %v823, %v859
        %v876 = vadd.f32 %v824, %v860
        %v877 = vadd.f32 %v825, %v861
        %v878 = vadd.f32 %v826, %v862
        %v879 = vadd.f32 %v827, %v863
        %v880 = vadd.f32 %v828, %v864
        %v881 = vadd.f32 %v829, %v865
        %v882 = vpack.c.bf16 %v867, %v866
        %v883 = vpack.c.bf16 %v869, %v868
        %v884 = vpack.c.bf16 %v871, %v870
        %v885 = vpack.c.bf16 %v873, %v872
        %v886 = vpack.c.bf16 %v875, %v874
        %v887 = vpack.c.bf16 %v877, %v876
        %v888 = vpack.c.bf16 %v879, %v878
        %v889 = vpack.c.bf16 %v881, %v880
        %v892 = vunpack.c.l.b16 %v418
        %v893 = vunpack.c.l.b16 %v419
        %v894 = vpack.c.b16 %v893, %v892
        %v897 = vsel %vm385, %v882, 0
        %v900 = vsel %vm385, %v883, 0
        %v903 = vsel %vm385, %v884, 0
        %v906 = vsel %vm385, %v885, 0
        %v909 = vsel %vm385, %v886, 0
        %v912 = vsel %vm385, %v887, 0
        %v915 = vsel %vm385, %v888, 0
        %v918 = vsel %vm385, %v889, 0
        %920 = vmatprep.subr.bf16.mxu0 0
        %921 = vmatpush1.bf16.msra.mxu0 0
        %922 = vmatprep.subr.bf16.mxu0 0
        %923 = vmatpush1.bf16.msra.mxu0 0
        %924 = vmatprep.subr.bf16.mxu0 0
        %925 = vmatpush1.bf16.msra.mxu0 0
        %926 = vmatprep.subr.bf16.mxu0 0
        %927 = vmatpush1.bf16.msra.mxu0 0
        %928 = vmatprep.subr.bf16.mxu0 0
        %929 = vmatpush1.bf16.msra.mxu0 0
        %930 = vmatprep.subr.bf16.mxu0 0
        %931 = vmatpush1.bf16.msra.mxu0 0
        %932 = vmatprep.subr.bf16.mxu0 0
        %933 = vmatpush1.bf16.msra.mxu0 0
        %934 = vmatprep.subr.bf16.mxu0 0
        %935 = vmatpush1.bf16.msra.mxu0 %v894
        %936 = vmatprep.subr.bf16.mxu0 0
        %937 = vmatpush2.bf16.msra.mxu0 0
        %938 = vmatprep.subr.bf16.mxu0 0
        %939 = vmatpush2.bf16.msra.mxu0 0
        %940 = vmatprep.subr.bf16.mxu0 0
        %941 = vmatpush2.bf16.msra.mxu0 0
        %942 = vmatprep.subr.bf16.mxu0 0
        %943 = vmatpush2.bf16.msra.mxu0 0
        %944 = vmatprep.subr.bf16.mxu0 0
        %945 = vmatpush2.bf16.msra.mxu0 0
        %946 = vmatprep.subr.bf16.mxu0 0
        %947 = vmatpush2.bf16.msra.mxu0 0
        %948 = vmatprep.subr.bf16.mxu0 0
        %949 = vmatpush2.bf16.msra.mxu0 0
        %950 = vmatprep.subr.bf16.mxu0 0
        %951 = vmatpush2.bf16.msra.mxu0 0
        %952 = vmatprep.mubr.bf16.mxu0 0
        %953 = vmatmul.mubr.bf16.gmra.mxu0 %v897
        %v954 = vpop.f32.mrf.mxu0
        %v955 = vadd.f32 0.0, %v954
        %v956 = vpop.f32.mrf.mxu0
        %v957 = vpop.f32.mrf.mxu0
        %v958 = vadd.f32 0.0, %v957
        %v959 = vpop.f32.mrf.mxu0
        %960 = vmatprep.mubr.bf16.mxu0 0
        %961 = vmatmul.mubr.bf16.gmra.mxu0 %v900
        %v962 = vpop.f32.mrf.mxu0
        %v963 = vadd.f32 0.0, %v962
        %v964 = vpop.f32.mrf.mxu0
        %v965 = vpop.f32.mrf.mxu0
        %v966 = vadd.f32 0.0, %v965
        %v967 = vpop.f32.mrf.mxu0
        %968 = vmatprep.mubr.bf16.mxu0 0
        %969 = vmatmul.mubr.bf16.gmra.mxu0 %v903
        %v970 = vpop.f32.mrf.mxu0
        %v971 = vadd.f32 0.0, %v970
        %v972 = vpop.f32.mrf.mxu0
        %v973 = vpop.f32.mrf.mxu0
        %v974 = vadd.f32 0.0, %v973
        %v975 = vpop.f32.mrf.mxu0
        %976 = vmatprep.mubr.bf16.mxu0 0
        %977 = vmatmul.mubr.bf16.gmra.mxu0 %v906
        %v978 = vpop.f32.mrf.mxu0
        %v979 = vadd.f32 0.0, %v978
        %v980 = vpop.f32.mrf.mxu0
        %v981 = vpop.f32.mrf.mxu0
        %v982 = vadd.f32 0.0, %v981
        %v983 = vpop.f32.mrf.mxu0
        %984 = vmatprep.mubr.bf16.mxu0 0
        %985 = vmatmul.mubr.bf16.gmra.mxu0 %v909
        %v986 = vpop.f32.mrf.mxu0
        %v987 = vadd.f32 0.0, %v986
        %v988 = vpop.f32.mrf.mxu0
        %v989 = vpop.f32.mrf.mxu0
        %v990 = vadd.f32 0.0, %v989
        %v991 = vpop.f32.mrf.mxu0
        %992 = vmatprep.mubr.bf16.mxu0 0
        %993 = vmatmul.mubr.bf16.gmra.mxu0 %v912
        %v994 = vpop.f32.mrf.mxu0
        %v995 = vadd.f32 0.0, %v994
        %v996 = vpop.f32.mrf.mxu0
        %v997 = vpop.f32.mrf.mxu0
        %v998 = vadd.f32 0.0, %v997
        %v999 = vpop.f32.mrf.mxu0
        %1000 = vmatprep.mubr.bf16.mxu0 0
        %1001 = vmatmul.mubr.bf16.gmra.mxu0 %v915
        %v1002 = vpop.f32.mrf.mxu0
        %v1003 = vadd.f32 0.0, %v1002
        %v1004 = vpop.f32.mrf.mxu0
        %v1005 = vpop.f32.mrf.mxu0
        %v1006 = vadd.f32 0.0, %v1005
        %v1007 = vpop.f32.mrf.mxu0
        %1008 = vmatprep.mubr.bf16.mxu0 0
        %1009 = vmatmul.mubr.bf16.gmra.mxu0 %v918
        %v1010 = vpop.f32.mrf.mxu0
        %v1011 = vadd.f32 0.0, %v1010
        %v1012 = vpop.f32.mrf.mxu0
        %v1013 = vpop.f32.mrf.mxu0
        %v1014 = vadd.f32 0.0, %v1013
        %v1015 = vpop.f32.mrf.mxu0
        %1016 = vdwg.mxu0
        %v1017 = vld [vmem:[%s239] sm:$0xff]
        %v1018 = vld [vmem:[%s239 + $0x8] sm:$0xff]
        %v1019 = vld [vmem:[%s239 + $0x10] sm:$0xff]
        %v1020 = vld [vmem:[%s239 + $0x18] sm:$0xff]
        %v1021 = vld [vmem:[%s239 + $0x20] sm:$0xff]
        %v1022 = vld [vmem:[%s239 + $0x28] sm:$0xff]
        %v1023 = vld [vmem:[%s239 + $0x30] sm:$0xff]
        %v1024 = vld [vmem:[%s239 + $0x38] sm:$0xff]
        %v1025 = vld [vmem:[%s239 + $0x40] sm:$0xff]
        %v1026 = vld [vmem:[%s239 + $0x48] sm:$0xff]
        %v1027 = vld [vmem:[%s239 + $0x50] sm:$0xff]
        %v1028 = vld [vmem:[%s239 + $0x58] sm:$0xff]
        %v1029 = vld [vmem:[%s239 + $0x60] sm:$0xff]
        %v1030 = vld [vmem:[%s239 + $0x68] sm:$0xff]
        %v1031 = vld [vmem:[%s239 + $0x70] sm:$0xff]
        %v1032 = vld [vmem:[%s239 + $0x78] sm:$0xff]
        %v1033 = vadd.f32 %v1017, %v955
        %v1034 = vadd.f32 %v1018, %v958
        %v1035 = vadd.f32 %v1019, %v963
        %v1036 = vadd.f32 %v1020, %v966
        %v1037 = vadd.f32 %v1021, %v971
        %v1038 = vadd.f32 %v1022, %v974
        %v1039 = vadd.f32 %v1023, %v979
        %v1040 = vadd.f32 %v1024, %v982
        %v1041 = vadd.f32 %v1025, %v987
        %v1042 = vadd.f32 %v1026, %v990
        %v1043 = vadd.f32 %v1027, %v995
        %v1044 = vadd.f32 %v1028, %v998
        %v1045 = vadd.f32 %v1029, %v1003
        %v1046 = vadd.f32 %v1030, %v1006
        %v1047 = vadd.f32 %v1031, %v1011
        %v1048 = vadd.f32 %v1032, %v1014
        %vm1049 = vcmask 261120
        %1050 = vst.msk [vmem:[%s239] sm:$0xff] %vm1049, %v1033
        %1051 = vst.msk [vmem:[%s239 + $0x8] sm:$0xff] %vm1049, %v1034
        %1052 = vst.msk [vmem:[%s239 + $0x10] sm:$0xff] %vm1049, %v1035
        %1053 = vst.msk [vmem:[%s239 + $0x18] sm:$0xff] %vm1049, %v1036
        %1054 = vst.msk [vmem:[%s239 + $0x20] sm:$0xff] %vm1049, %v1037
        %1055 = vst.msk [vmem:[%s239 + $0x28] sm:$0xff] %vm1049, %v1038
        %1056 = vst.msk [vmem:[%s239 + $0x30] sm:$0xff] %vm1049, %v1039
        %1057 = vst.msk [vmem:[%s239 + $0x38] sm:$0xff] %vm1049, %v1040
        %1058 = vst.msk [vmem:[%s239 + $0x40] sm:$0xff] %vm1049, %v1041
        %1059 = vst.msk [vmem:[%s239 + $0x48] sm:$0xff] %vm1049, %v1042
        %1060 = vst.msk [vmem:[%s239 + $0x50] sm:$0xff] %vm1049, %v1043
        %1061 = vst.msk [vmem:[%s239 + $0x58] sm:$0xff] %vm1049, %v1044
        %1062 = vst.msk [vmem:[%s239 + $0x60] sm:$0xff] %vm1049, %v1045
        %1063 = vst.msk [vmem:[%s239 + $0x68] sm:$0xff] %vm1049, %v1046
        %1064 = vst.msk [vmem:[%s239 + $0x70] sm:$0xff] %vm1049, %v1047
        %1065 = vst.msk [vmem:[%s239 + $0x78] sm:$0xff] %vm1049, %v1048
        %s1066 = smul.u32 8, 24
        %s1067 = scalar_lea.vmem [#allocation2], %s1066
        %v1068 = vld [vmem:[%s1067] sm:$0xff]
        %v1069 = vld [vmem:[%s1067 + $0x8] sm:$0xff]
        %v1070 = vld [vmem:[%s1067 + $0x18] sm:$0xff]
        %v1071 = vld [vmem:[%s1067 + $0x20] sm:$0xff]
        %v1072 = vld [vmem:[%s1067 + $0x30] sm:$0xff]
        %v1073 = vld [vmem:[%s1067 + $0x38] sm:$0xff]
        %v1074 = vld [vmem:[%s1067 + $0x48] sm:$0xff]
        %v1075 = vld [vmem:[%s1067 + $0x50] sm:$0xff]
        %v1076 = vld [vmem:[%s1067 + $0x60] sm:$0xff]
        %v1077 = vld [vmem:[%s1067 + $0x68] sm:$0xff]
        %v1078 = vld [vmem:[%s1067 + $0x78] sm:$0xff]
        %v1079 = vld [vmem:[%s1067 + $0x80] sm:$0xff]
        %v1080 = vld [vmem:[%s1067 + $0x90] sm:$0xff]
        %v1081 = vld [vmem:[%s1067 + $0x98] sm:$0xff]
        %v1082 = vld [vmem:[%s1067 + $0xa8] sm:$0xff]
        %v1083 = vld [vmem:[%s1067 + $0xb0] sm:$0xff]
        %v1084 = vmul.f32 %v1068, %v443
        %v1085 = vmul.f32 %v1069, %v443
        %v1086 = vmul.f32 %v1070, %v443
        %v1087 = vmul.f32 %v1071, %v443
        %v1088 = vmul.f32 %v1072, %v443
        %v1089 = vmul.f32 %v1073, %v443
        %v1090 = vmul.f32 %v1074, %v443
        %v1091 = vmul.f32 %v1075, %v443
        %v1092 = vmul.f32 %v1076, %v443
        %v1093 = vmul.f32 %v1077, %v443
        %v1094 = vmul.f32 %v1078, %v443
        %v1095 = vmul.f32 %v1079, %v443
        %v1096 = vmul.f32 %v1080, %v443
        %v1097 = vmul.f32 %v1081, %v443
        %v1098 = vmul.f32 %v1082, %v443
        %v1099 = vmul.f32 %v1083, %v443
        %v1100 = vld [vmem:[%s1067 + $0x1] sm:$0xff]
        %v1101 = vld [vmem:[%s1067 + $0x9] sm:$0xff]
        %v1102 = vld [vmem:[%s1067 + $0x19] sm:$0xff]
        %v1103 = vld [vmem:[%s1067 + $0x21] sm:$0xff]
        %v1104 = vld [vmem:[%s1067 + $0x31] sm:$0xff]
        %v1105 = vld [vmem:[%s1067 + $0x39] sm:$0xff]
        %v1106 = vld [vmem:[%s1067 + $0x49] sm:$0xff]
        %v1107 = vld [vmem:[%s1067 + $0x51] sm:$0xff]
        %v1108 = vld [vmem:[%s1067 + $0x61] sm:$0xff]
        %v1109 = vld [vmem:[%s1067 + $0x69] sm:$0xff]
        %v1110 = vld [vmem:[%s1067 + $0x79] sm:$0xff]
        %v1111 = vld [vmem:[%s1067 + $0x81] sm:$0xff]
        %v1112 = vld [vmem:[%s1067 + $0x91] sm:$0xff]
        %v1113 = vld [vmem:[%s1067 + $0x99] sm:$0xff]
        %v1114 = vld [vmem:[%s1067 + $0xa9] sm:$0xff]
        %v1115 = vld [vmem:[%s1067 + $0xb1] sm:$0xff]
        %v1116 = vmul.f32 %v1100, %v479
        %v1117 = vmul.f32 %v1101, %v479
        %v1118 = vmul.f32 %v1102, %v479
        %v1119 = vmul.f32 %v1103, %v479
        %v1120 = vmul.f32 %v1104, %v479
        %v1121 = vmul.f32 %v1105, %v479
        %v1122 = vmul.f32 %v1106, %v479
        %v1123 = vmul.f32 %v1107, %v479
        %v1124 = vmul.f32 %v1108, %v479
        %v1125 = vmul.f32 %v1109, %v479
        %v1126 = vmul.f32 %v1110, %v479
        %v1127 = vmul.f32 %v1111, %v479
        %v1128 = vmul.f32 %v1112, %v479
        %v1129 = vmul.f32 %v1113, %v479
        %v1130 = vmul.f32 %v1114, %v479
        %v1131 = vmul.f32 %v1115, %v479
        %v1132 = vadd.f32 %v1084, %v1116
        %v1133 = vadd.f32 %v1085, %v1117
        %v1134 = vadd.f32 %v1086, %v1118
        %v1135 = vadd.f32 %v1087, %v1119
        %v1136 = vadd.f32 %v1088, %v1120
        %v1137 = vadd.f32 %v1089, %v1121
        %v1138 = vadd.f32 %v1090, %v1122
        %v1139 = vadd.f32 %v1091, %v1123
        %v1140 = vadd.f32 %v1092, %v1124
        %v1141 = vadd.f32 %v1093, %v1125
        %v1142 = vadd.f32 %v1094, %v1126
        %v1143 = vadd.f32 %v1095, %v1127
        %v1144 = vadd.f32 %v1096, %v1128
        %v1145 = vadd.f32 %v1097, %v1129
        %v1146 = vadd.f32 %v1098, %v1130
        %v1147 = vadd.f32 %v1099, %v1131
        %v1148 = vld [vmem:[%s1067 + $0x2] sm:$0xff]
        %v1149 = vld [vmem:[%s1067 + $0xa] sm:$0xff]
        %v1150 = vld [vmem:[%s1067 + $0x1a] sm:$0xff]
        %v1151 = vld [vmem:[%s1067 + $0x22] sm:$0xff]
        %v1152 = vld [vmem:[%s1067 + $0x32] sm:$0xff]
        %v1153 = vld [vmem:[%s1067 + $0x3a] sm:$0xff]
        %v1154 = vld [vmem:[%s1067 + $0x4a] sm:$0xff]
        %v1155 = vld [vmem:[%s1067 + $0x52] sm:$0xff]
        %v1156 = vld [vmem:[%s1067 + $0x62] sm:$0xff]
        %v1157 = vld [vmem:[%s1067 + $0x6a] sm:$0xff]
        %v1158 = vld [vmem:[%s1067 + $0x7a] sm:$0xff]
        %v1159 = vld [vmem:[%s1067 + $0x82] sm:$0xff]
        %v1160 = vld [vmem:[%s1067 + $0x92] sm:$0xff]
        %v1161 = vld [vmem:[%s1067 + $0x9a] sm:$0xff]
        %v1162 = vld [vmem:[%s1067 + $0xaa] sm:$0xff]
        %v1163 = vld [vmem:[%s1067 + $0xb2] sm:$0xff]
        %v1164 = vmul.f32 %v1148, %v531
        %v1165 = vmul.f32 %v1149, %v531
        %v1166 = vmul.f32 %v1150, %v531
        %v1167 = vmul.f32 %v1151, %v531
        %v1168 = vmul.f32 %v1152, %v531
        %v1169 = vmul.f32 %v1153, %v531
        %v1170 = vmul.f32 %v1154, %v531
        %v1171 = vmul.f32 %v1155, %v531
        %v1172 = vmul.f32 %v1156, %v531
        %v1173 = vmul.f32 %v1157, %v531
        %v1174 = vmul.f32 %v1158, %v531
        %v1175 = vmul.f32 %v1159, %v531
        %v1176 = vmul.f32 %v1160, %v531
        %v1177 = vmul.f32 %v1161, %v531
        %v1178 = vmul.f32 %v1162, %v531
        %v1179 = vmul.f32 %v1163, %v531
        %v1180 = vadd.f32 %v1132, %v1164
        %v1181 = vadd.f32 %v1133, %v1165
        %v1182 = vadd.f32 %v1134, %v1166
        %v1183 = vadd.f32 %v1135, %v1167
        %v1184 = vadd.f32 %v1136, %v1168
        %v1185 = vadd.f32 %v1137, %v1169
        %v1186 = vadd.f32 %v1138, %v1170
        %v1187 = vadd.f32 %v1139, %v1171
        %v1188 = vadd.f32 %v1140, %v1172
        %v1189 = vadd.f32 %v1141, %v1173
        %v1190 = vadd.f32 %v1142, %v1174
        %v1191 = vadd.f32 %v1143, %v1175
        %v1192 = vadd.f32 %v1144, %v1176
        %v1193 = vadd.f32 %v1145, %v1177
        %v1194 = vadd.f32 %v1146, %v1178
        %v1195 = vadd.f32 %v1147, %v1179
        %s1196 = sadd.s32 8, 1
        %s1197 = smul.u32 %s1196, 24
        %s1198 = scalar_lea.vmem [#allocation2], %s1197
        %v1199 = vld [vmem:[%s1198] sm:$0xff]
        %v1200 = vld [vmem:[%s1198 + $0x8] sm:$0xff]
        %v1201 = vld [vmem:[%s1198 + $0x18] sm:$0xff]
        %v1202 = vld [vmem:[%s1198 + $0x20] sm:$0xff]
        %v1203 = vld [vmem:[%s1198 + $0x30] sm:$0xff]
        %v1204 = vld [vmem:[%s1198 + $0x38] sm:$0xff]
        %v1205 = vld [vmem:[%s1198 + $0x48] sm:$0xff]
        %v1206 = vld [vmem:[%s1198 + $0x50] sm:$0xff]
        %v1207 = vld [vmem:[%s1198 + $0x60] sm:$0xff]
        %v1208 = vld [vmem:[%s1198 + $0x68] sm:$0xff]
        %v1209 = vld [vmem:[%s1198 + $0x78] sm:$0xff]
        %v1210 = vld [vmem:[%s1198 + $0x80] sm:$0xff]
        %v1211 = vld [vmem:[%s1198 + $0x90] sm:$0xff]
        %v1212 = vld [vmem:[%s1198 + $0x98] sm:$0xff]
        %v1213 = vld [vmem:[%s1198 + $0xa8] sm:$0xff]
        %v1214 = vld [vmem:[%s1198 + $0xb0] sm:$0xff]
        %v1215 = vmul.f32 %v1199, %v586
        %v1216 = vmul.f32 %v1200, %v586
        %v1217 = vmul.f32 %v1201, %v586
        %v1218 = vmul.f32 %v1202, %v586
        %v1219 = vmul.f32 %v1203, %v586
        %v1220 = vmul.f32 %v1204, %v586
        %v1221 = vmul.f32 %v1205, %v586
        %v1222 = vmul.f32 %v1206, %v586
        %v1223 = vmul.f32 %v1207, %v586
        %v1224 = vmul.f32 %v1208, %v586
        %v1225 = vmul.f32 %v1209, %v586
        %v1226 = vmul.f32 %v1210, %v586
        %v1227 = vmul.f32 %v1211, %v586
        %v1228 = vmul.f32 %v1212, %v586
        %v1229 = vmul.f32 %v1213, %v586
        %v1230 = vmul.f32 %v1214, %v586
        %v1231 = vadd.f32 %v1180, %v1215
        %v1232 = vadd.f32 %v1181, %v1216
        %v1233 = vadd.f32 %v1182, %v1217
        %v1234 = vadd.f32 %v1183, %v1218
        %v1235 = vadd.f32 %v1184, %v1219
        %v1236 = vadd.f32 %v1185, %v1220
        %v1237 = vadd.f32 %v1186, %v1221
        %v1238 = vadd.f32 %v1187, %v1222
        %v1239 = vadd.f32 %v1188, %v1223
        %v1240 = vadd.f32 %v1189, %v1224
        %v1241 = vadd.f32 %v1190, %v1225
        %v1242 = vadd.f32 %v1191, %v1226
        %v1243 = vadd.f32 %v1192, %v1227
        %v1244 = vadd.f32 %v1193, %v1228
        %v1245 = vadd.f32 %v1194, %v1229
        %v1246 = vadd.f32 %v1195, %v1230
        %v1247 = vld [vmem:[%s1198 + $0x1] sm:$0xff]
        %v1248 = vld [vmem:[%s1198 + $0x9] sm:$0xff]
        %v1249 = vld [vmem:[%s1198 + $0x19] sm:$0xff]
        %v1250 = vld [vmem:[%s1198 + $0x21] sm:$0xff]
        %v1251 = vld [vmem:[%s1198 + $0x31] sm:$0xff]
        %v1252 = vld [vmem:[%s1198 + $0x39] sm:$0xff]
        %v1253 = vld [vmem:[%s1198 + $0x49] sm:$0xff]
        %v1254 = vld [vmem:[%s1198 + $0x51] sm:$0xff]
        %v1255 = vld [vmem:[%s1198 + $0x61] sm:$0xff]
        %v1256 = vld [vmem:[%s1198 + $0x69] sm:$0xff]
        %v1257 = vld [vmem:[%s1198 + $0x79] sm:$0xff]
        %v1258 = vld [vmem:[%s1198 + $0x81] sm:$0xff]
        %v1259 = vld [vmem:[%s1198 + $0x91] sm:$0xff]
        %v1260 = vld [vmem:[%s1198 + $0x99] sm:$0xff]
        %v1261 = vld [vmem:[%s1198 + $0xa9] sm:$0xff]
        %v1262 = vld [vmem:[%s1198 + $0xb1] sm:$0xff]
        %v1263 = vmul.f32 %v1247, %v638
        %v1264 = vmul.f32 %v1248, %v638
        %v1265 = vmul.f32 %v1249, %v638
        %v1266 = vmul.f32 %v1250, %v638
        %v1267 = vmul.f32 %v1251, %v638
        %v1268 = vmul.f32 %v1252, %v638
        %v1269 = vmul.f32 %v1253, %v638
        %v1270 = vmul.f32 %v1254, %v638
        %v1271 = vmul.f32 %v1255, %v638
        %v1272 = vmul.f32 %v1256, %v638
        %v1273 = vmul.f32 %v1257, %v638
        %v1274 = vmul.f32 %v1258, %v638
        %v1275 = vmul.f32 %v1259, %v638
        %v1276 = vmul.f32 %v1260, %v638
        %v1277 = vmul.f32 %v1261, %v638
        %v1278 = vmul.f32 %v1262, %v638
        %v1279 = vadd.f32 %v1231, %v1263
        %v1280 = vadd.f32 %v1232, %v1264
        %v1281 = vadd.f32 %v1233, %v1265
        %v1282 = vadd.f32 %v1234, %v1266
        %v1283 = vadd.f32 %v1235, %v1267
        %v1284 = vadd.f32 %v1236, %v1268
        %v1285 = vadd.f32 %v1237, %v1269
        %v1286 = vadd.f32 %v1238, %v1270
        %v1287 = vadd.f32 %v1239, %v1271
        %v1288 = vadd.f32 %v1240, %v1272
        %v1289 = vadd.f32 %v1241, %v1273
        %v1290 = vadd.f32 %v1242, %v1274
        %v1291 = vadd.f32 %v1243, %v1275
        %v1292 = vadd.f32 %v1244, %v1276
        %v1293 = vadd.f32 %v1245, %v1277
        %v1294 = vadd.f32 %v1246, %v1278
        %v1295 = vld [vmem:[%s1198 + $0x2] sm:$0xff]
        %v1296 = vld [vmem:[%s1198 + $0xa] sm:$0xff]
        %v1297 = vld [vmem:[%s1198 + $0x1a] sm:$0xff]
        %v1298 = vld [vmem:[%s1198 + $0x22] sm:$0xff]
        %v1299 = vld [vmem:[%s1198 + $0x32] sm:$0xff]
        %v1300 = vld [vmem:[%s1198 + $0x3a] sm:$0xff]
        %v1301 = vld [vmem:[%s1198 + $0x4a] sm:$0xff]
        %v1302 = vld [vmem:[%s1198 + $0x52] sm:$0xff]
        %v1303 = vld [vmem:[%s1198 + $0x62] sm:$0xff]
        %v1304 = vld [vmem:[%s1198 + $0x6a] sm:$0xff]
        %v1305 = vld [vmem:[%s1198 + $0x7a] sm:$0xff]
        %v1306 = vld [vmem:[%s1198 + $0x82] sm:$0xff]
        %v1307 = vld [vmem:[%s1198 + $0x92] sm:$0xff]
        %v1308 = vld [vmem:[%s1198 + $0x9a] sm:$0xff]
        %v1309 = vld [vmem:[%s1198 + $0xaa] sm:$0xff]
        %v1310 = vld [vmem:[%s1198 + $0xb2] sm:$0xff]
        %v1311 = vmul.f32 %v1295, %v690
        %v1312 = vmul.f32 %v1296, %v690
        %v1313 = vmul.f32 %v1297, %v690
        %v1314 = vmul.f32 %v1298, %v690
        %v1315 = vmul.f32 %v1299, %v690
        %v1316 = vmul.f32 %v1300, %v690
        %v1317 = vmul.f32 %v1301, %v690
        %v1318 = vmul.f32 %v1302, %v690
        %v1319 = vmul.f32 %v1303, %v690
        %v1320 = vmul.f32 %v1304, %v690
        %v1321 = vmul.f32 %v1305, %v690
        %v1322 = vmul.f32 %v1306, %v690
        %v1323 = vmul.f32 %v1307, %v690
        %v1324 = vmul.f32 %v1308, %v690
        %v1325 = vmul.f32 %v1309, %v690
        %v1326 = vmul.f32 %v1310, %v690
        %v1327 = vadd.f32 %v1279, %v1311
        %v1328 = vadd.f32 %v1280, %v1312
        %v1329 = vadd.f32 %v1281, %v1313
        %v1330 = vadd.f32 %v1282, %v1314
        %v1331 = vadd.f32 %v1283, %v1315
        %v1332 = vadd.f32 %v1284, %v1316
        %v1333 = vadd.f32 %v1285, %v1317
        %v1334 = vadd.f32 %v1286, %v1318
        %v1335 = vadd.f32 %v1287, %v1319
        %v1336 = vadd.f32 %v1288, %v1320
        %v1337 = vadd.f32 %v1289, %v1321
        %v1338 = vadd.f32 %v1290, %v1322
        %v1339 = vadd.f32 %v1291, %v1323
        %v1340 = vadd.f32 %v1292, %v1324
        %v1341 = vadd.f32 %v1293, %v1325
        %v1342 = vadd.f32 %v1294, %v1326
        %s1343 = sadd.s32 8, 2
        %s1344 = smul.u32 %s1343, 24
        %s1345 = scalar_lea.vmem [#allocation2], %s1344
        %v1346 = vld [vmem:[%s1345] sm:$0xff]
        %v1347 = vld [vmem:[%s1345 + $0x8] sm:$0xff]
        %v1348 = vld [vmem:[%s1345 + $0x18] sm:$0xff]
        %v1349 = vld [vmem:[%s1345 + $0x20] sm:$0xff]
        %v1350 = vld [vmem:[%s1345 + $0x30] sm:$0xff]
        %v1351 = vld [vmem:[%s1345 + $0x38] sm:$0xff]
        %v1352 = vld [vmem:[%s1345 + $0x48] sm:$0xff]
        %v1353 = vld [vmem:[%s1345 + $0x50] sm:$0xff]
        %v1354 = vld [vmem:[%s1345 + $0x60] sm:$0xff]
        %v1355 = vld [vmem:[%s1345 + $0x68] sm:$0xff]
        %v1356 = vld [vmem:[%s1345 + $0x78] sm:$0xff]
        %v1357 = vld [vmem:[%s1345 + $0x80] sm:$0xff]
        %v1358 = vld [vmem:[%s1345 + $0x90] sm:$0xff]
        %v1359 = vld [vmem:[%s1345 + $0x98] sm:$0xff]
        %v1360 = vld [vmem:[%s1345 + $0xa8] sm:$0xff]
        %v1361 = vld [vmem:[%s1345 + $0xb0] sm:$0xff]
        %v1362 = vmul.f32 %v1346, %v745
        %v1363 = vmul.f32 %v1347, %v745
        %v1364 = vmul.f32 %v1348, %v745
        %v1365 = vmul.f32 %v1349, %v745
        %v1366 = vmul.f32 %v1350, %v745
        %v1367 = vmul.f32 %v1351, %v745
        %v1368 = vmul.f32 %v1352, %v745
        %v1369 = vmul.f32 %v1353, %v745
        %v1370 = vmul.f32 %v1354, %v745
        %v1371 = vmul.f32 %v1355, %v745
        %v1372 = vmul.f32 %v1356, %v745
        %v1373 = vmul.f32 %v1357, %v745
        %v1374 = vmul.f32 %v1358, %v745
        %v1375 = vmul.f32 %v1359, %v745
        %v1376 = vmul.f32 %v1360, %v745
        %v1377 = vmul.f32 %v1361, %v745
        %v1378 = vadd.f32 %v1327, %v1362
        %v1379 = vadd.f32 %v1328, %v1363
        %v1380 = vadd.f32 %v1329, %v1364
        %v1381 = vadd.f32 %v1330, %v1365
        %v1382 = vadd.f32 %v1331, %v1366
        %v1383 = vadd.f32 %v1332, %v1367
        %v1384 = vadd.f32 %v1333, %v1368
        %v1385 = vadd.f32 %v1334, %v1369
        %v1386 = vadd.f32 %v1335, %v1370
        %v1387 = vadd.f32 %v1336, %v1371
        %v1388 = vadd.f32 %v1337, %v1372
        %v1389 = vadd.f32 %v1338, %v1373
        %v1390 = vadd.f32 %v1339, %v1374
        %v1391 = vadd.f32 %v1340, %v1375
        %v1392 = vadd.f32 %v1341, %v1376
        %v1393 = vadd.f32 %v1342, %v1377
        %v1394 = vld [vmem:[%s1345 + $0x1] sm:$0xff]
        %v1395 = vld [vmem:[%s1345 + $0x9] sm:$0xff]
        %v1396 = vld [vmem:[%s1345 + $0x19] sm:$0xff]
        %v1397 = vld [vmem:[%s1345 + $0x21] sm:$0xff]
        %v1398 = vld [vmem:[%s1345 + $0x31] sm:$0xff]
        %v1399 = vld [vmem:[%s1345 + $0x39] sm:$0xff]
        %v1400 = vld [vmem:[%s1345 + $0x49] sm:$0xff]
        %v1401 = vld [vmem:[%s1345 + $0x51] sm:$0xff]
        %v1402 = vld [vmem:[%s1345 + $0x61] sm:$0xff]
        %v1403 = vld [vmem:[%s1345 + $0x69] sm:$0xff]
        %v1404 = vld [vmem:[%s1345 + $0x79] sm:$0xff]
        %v1405 = vld [vmem:[%s1345 + $0x81] sm:$0xff]
        %v1406 = vld [vmem:[%s1345 + $0x91] sm:$0xff]
        %v1407 = vld [vmem:[%s1345 + $0x99] sm:$0xff]
        %v1408 = vld [vmem:[%s1345 + $0xa9] sm:$0xff]
        %v1409 = vld [vmem:[%s1345 + $0xb1] sm:$0xff]
        %v1410 = vmul.f32 %v1394, %v797
        %v1411 = vmul.f32 %v1395, %v797
        %v1412 = vmul.f32 %v1396, %v797
        %v1413 = vmul.f32 %v1397, %v797
        %v1414 = vmul.f32 %v1398, %v797
        %v1415 = vmul.f32 %v1399, %v797
        %v1416 = vmul.f32 %v1400, %v797
        %v1417 = vmul.f32 %v1401, %v797
        %v1418 = vmul.f32 %v1402, %v797
        %v1419 = vmul.f32 %v1403, %v797
        %v1420 = vmul.f32 %v1404, %v797
        %v1421 = vmul.f32 %v1405, %v797
        %v1422 = vmul.f32 %v1406, %v797
        %v1423 = vmul.f32 %v1407, %v797
        %v1424 = vmul.f32 %v1408, %v797
        %v1425 = vmul.f32 %v1409, %v797
        %v1426 = vadd.f32 %v1378, %v1410
        %v1427 = vadd.f32 %v1379, %v1411
        %v1428 = vadd.f32 %v1380, %v1412
        %v1429 = vadd.f32 %v1381, %v1413
        %v1430 = vadd.f32 %v1382, %v1414
        %v1431 = vadd.f32 %v1383, %v1415
        %v1432 = vadd.f32 %v1384, %v1416
        %v1433 = vadd.f32 %v1385, %v1417
        %v1434 = vadd.f32 %v1386, %v1418
        %v1435 = vadd.f32 %v1387, %v1419
        %v1436 = vadd.f32 %v1388, %v1420
        %v1437 = vadd.f32 %v1389, %v1421
        %v1438 = vadd.f32 %v1390, %v1422
        %v1439 = vadd.f32 %v1391, %v1423
        %v1440 = vadd.f32 %v1392, %v1424
        %v1441 = vadd.f32 %v1393, %v1425
        %v1442 = vld [vmem:[%s1345 + $0x2] sm:$0xff]
        %v1443 = vld [vmem:[%s1345 + $0xa] sm:$0xff]
        %v1444 = vld [vmem:[%s1345 + $0x1a] sm:$0xff]
        %v1445 = vld [vmem:[%s1345 + $0x22] sm:$0xff]
        %v1446 = vld [vmem:[%s1345 + $0x32] sm:$0xff]
        %v1447 = vld [vmem:[%s1345 + $0x3a] sm:$0xff]
        %v1448 = vld [vmem:[%s1345 + $0x4a] sm:$0xff]
        %v1449 = vld [vmem:[%s1345 + $0x52] sm:$0xff]
        %v1450 = vld [vmem:[%s1345 + $0x62] sm:$0xff]
        %v1451 = vld [vmem:[%s1345 + $0x6a] sm:$0xff]
        %v1452 = vld [vmem:[%s1345 + $0x7a] sm:$0xff]
        %v1453 = vld [vmem:[%s1345 + $0x82] sm:$0xff]
        %v1454 = vld [vmem:[%s1345 + $0x92] sm:$0xff]
        %v1455 = vld [vmem:[%s1345 + $0x9a] sm:$0xff]
        %v1456 = vld [vmem:[%s1345 + $0xaa] sm:$0xff]
        %v1457 = vld [vmem:[%s1345 + $0xb2] sm:$0xff]
        %v1458 = vmul.f32 %v1442, %v849
        %v1459 = vmul.f32 %v1443, %v849
        %v1460 = vmul.f32 %v1444, %v849
        %v1461 = vmul.f32 %v1445, %v849
        %v1462 = vmul.f32 %v1446, %v849
        %v1463 = vmul.f32 %v1447, %v849
        %v1464 = vmul.f32 %v1448, %v849
        %v1465 = vmul.f32 %v1449, %v849
        %v1466 = vmul.f32 %v1450, %v849
        %v1467 = vmul.f32 %v1451, %v849
        %v1468 = vmul.f32 %v1452, %v849
        %v1469 = vmul.f32 %v1453, %v849
        %v1470 = vmul.f32 %v1454, %v849
        %v1471 = vmul.f32 %v1455, %v849
        %v1472 = vmul.f32 %v1456, %v849
        %v1473 = vmul.f32 %v1457, %v849
        %v1474 = vadd.f32 %v1426, %v1458
        %v1475 = vadd.f32 %v1427, %v1459
        %v1476 = vadd.f32 %v1428, %v1460
        %v1477 = vadd.f32 %v1429, %v1461
        %v1478 = vadd.f32 %v1430, %v1462
        %v1479 = vadd.f32 %v1431, %v1463
        %v1480 = vadd.f32 %v1432, %v1464
        %v1481 = vadd.f32 %v1433, %v1465
        %v1482 = vadd.f32 %v1434, %v1466
        %v1483 = vadd.f32 %v1435, %v1467
        %v1484 = vadd.f32 %v1436, %v1468
        %v1485 = vadd.f32 %v1437, %v1469
        %v1486 = vadd.f32 %v1438, %v1470
        %v1487 = vadd.f32 %v1439, %v1471
        %v1488 = vadd.f32 %v1440, %v1472
        %v1489 = vadd.f32 %v1441, %v1473
        %v1490 = vpack.c.bf16 %v1475, %v1474
        %v1491 = vpack.c.bf16 %v1477, %v1476
        %v1492 = vpack.c.bf16 %v1479, %v1478
        %v1493 = vpack.c.bf16 %v1481, %v1480
        %v1494 = vpack.c.bf16 %v1483, %v1482
        %v1495 = vpack.c.bf16 %v1485, %v1484
        %v1496 = vpack.c.bf16 %v1487, %v1486
        %v1497 = vpack.c.bf16 %v1489, %v1488
        %v1499 = vsel %vm385, %v1490, 0
        %v1502 = vsel %vm385, %v1491, 0
        %v1505 = vsel %vm385, %v1492, 0
        %v1508 = vsel %vm385, %v1493, 0
        %v1511 = vsel %vm385, %v1494, 0
        %v1514 = vsel %vm385, %v1495, 0
        %v1517 = vsel %vm385, %v1496, 0
        %v1520 = vsel %vm385, %v1497, 0
        %1522 = vmatprep.subr.bf16.mxu0 0
        %1523 = vmatpush1.bf16.msra.mxu0 0
        %1524 = vmatprep.subr.bf16.mxu0 0
        %1525 = vmatpush1.bf16.msra.mxu0 0
        %1526 = vmatprep.subr.bf16.mxu0 0
        %1527 = vmatpush1.bf16.msra.mxu0 0
        %1528 = vmatprep.subr.bf16.mxu0 0
        %1529 = vmatpush1.bf16.msra.mxu0 0
        %1530 = vmatprep.subr.bf16.mxu0 0
        %1531 = vmatpush1.bf16.msra.mxu0 0
        %1532 = vmatprep.subr.bf16.mxu0 0
        %1533 = vmatpush1.bf16.msra.mxu0 0
        %1534 = vmatprep.subr.bf16.mxu0 0
        %1535 = vmatpush1.bf16.msra.mxu0 0
        %1536 = vmatprep.subr.bf16.mxu0 0
        %1537 = vmatpush1.bf16.msra.mxu0 %v894
        %1538 = vmatprep.subr.bf16.mxu0 0
        %1539 = vmatpush2.bf16.msra.mxu0 0
        %1540 = vmatprep.subr.bf16.mxu0 0
        %1541 = vmatpush2.bf16.msra.mxu0 0
        %1542 = vmatprep.subr.bf16.mxu0 0
        %1543 = vmatpush2.bf16.msra.mxu0 0
        %1544 = vmatprep.subr.bf16.mxu0 0
        %1545 = vmatpush2.bf16.msra.mxu0 0
        %1546 = vmatprep.subr.bf16.mxu0 0
        %1547 = vmatpush2.bf16.msra.mxu0 0
        %1548 = vmatprep.subr.bf16.mxu0 0
        %1549 = vmatpush2.bf16.msra.mxu0 0
        %1550 = vmatprep.subr.bf16.mxu0 0
        %1551 = vmatpush2.bf16.msra.mxu0 0
        %1552 = vmatprep.subr.bf16.mxu0 0
        %1553 = vmatpush2.bf16.msra.mxu0 0
        %1554 = vmatprep.mubr.bf16.mxu0 0
        %1555 = vmatmul.mubr.bf16.gmra.mxu0 %v1499
        %v1556 = vpop.f32.mrf.mxu0
        %v1557 = vadd.f32 0.0, %v1556
        %v1558 = vpop.f32.mrf.mxu0
        %v1559 = vpop.f32.mrf.mxu0
        %v1560 = vadd.f32 0.0, %v1559
        %v1561 = vpop.f32.mrf.mxu0
        %1562 = vmatprep.mubr.bf16.mxu0 0
        %1563 = vmatmul.mubr.bf16.gmra.mxu0 %v1502
        %v1564 = vpop.f32.mrf.mxu0
        %v1565 = vadd.f32 0.0, %v1564
        %v1566 = vpop.f32.mrf.mxu0
        %v1567 = vpop.f32.mrf.mxu0
        %v1568 = vadd.f32 0.0, %v1567
        %v1569 = vpop.f32.mrf.mxu0
        %1570 = vmatprep.mubr.bf16.mxu0 0
        %1571 = vmatmul.mubr.bf16.gmra.mxu0 %v1505
        %v1572 = vpop.f32.mrf.mxu0
        %v1573 = vadd.f32 0.0, %v1572
        %v1574 = vpop.f32.mrf.mxu0
        %v1575 = vpop.f32.mrf.mxu0
        %v1576 = vadd.f32 0.0, %v1575
        %v1577 = vpop.f32.mrf.mxu0
        %1578 = vmatprep.mubr.bf16.mxu0 0
        %1579 = vmatmul.mubr.bf16.gmra.mxu0 %v1508
        %v1580 = vpop.f32.mrf.mxu0
        %v1581 = vadd.f32 0.0, %v1580
        %v1582 = vpop.f32.mrf.mxu0
        %v1583 = vpop.f32.mrf.mxu0
        %v1584 = vadd.f32 0.0, %v1583
        %v1585 = vpop.f32.mrf.mxu0
        %1586 = vmatprep.mubr.bf16.mxu0 0
        %1587 = vmatmul.mubr.bf16.gmra.mxu0 %v1511
        %v1588 = vpop.f32.mrf.mxu0
        %v1589 = vadd.f32 0.0, %v1588
        %v1590 = vpop.f32.mrf.mxu0
        %v1591 = vpop.f32.mrf.mxu0
        %v1592 = vadd.f32 0.0, %v1591
        %v1593 = vpop.f32.mrf.mxu0
        %1594 = vmatprep.mubr.bf16.mxu0 0
        %1595 = vmatmul.mubr.bf16.gmra.mxu0 %v1514
        %v1596 = vpop.f32.mrf.mxu0
        %v1597 = vadd.f32 0.0, %v1596
        %v1598 = vpop.f32.mrf.mxu0
        %v1599 = vpop.f32.mrf.mxu0
        %v1600 = vadd.f32 0.0, %v1599
        %v1601 = vpop.f32.mrf.mxu0
        %1602 = vmatprep.mubr.bf16.mxu0 0
        %1603 = vmatmul.mubr.bf16.gmra.mxu0 %v1517
        %v1604 = vpop.f32.mrf.mxu0
        %v1605 = vadd.f32 0.0, %v1604
        %v1606 = vpop.f32.mrf.mxu0
        %v1607 = vpop.f32.mrf.mxu0
        %v1608 = vadd.f32 0.0, %v1607
        %v1609 = vpop.f32.mrf.mxu0
        %1610 = vmatprep.mubr.bf16.mxu0 0
        %1611 = vmatmul.mubr.bf16.gmra.mxu0 %v1520
        %v1612 = vpop.f32.mrf.mxu0
        %v1613 = vadd.f32 0.0, %v1612
        %v1614 = vpop.f32.mrf.mxu0
        %v1615 = vpop.f32.mrf.mxu0
        %v1616 = vadd.f32 0.0, %v1615
        %v1617 = vpop.f32.mrf.mxu0
        %1618 = vdwg.mxu0
        %s1619 = scalar_lea.vmem %s239, 128 [#allocation3]
        %v1620 = vld [vmem:[%s1619] sm:$0xff]
        %v1621 = vld [vmem:[%s1619 + $0x8] sm:$0xff]
        %v1622 = vld [vmem:[%s1619 + $0x10] sm:$0xff]
        %v1623 = vld [vmem:[%s1619 + $0x18] sm:$0xff]
        %v1624 = vld [vmem:[%s1619 + $0x20] sm:$0xff]
        %v1625 = vld [vmem:[%s1619 + $0x28] sm:$0xff]
        %v1626 = vld [vmem:[%s1619 + $0x30] sm:$0xff]
        %v1627 = vld [vmem:[%s1619 + $0x38] sm:$0xff]
        %v1628 = vld [vmem:[%s1619 + $0x40] sm:$0xff]
        %v1629 = vld [vmem:[%s1619 + $0x48] sm:$0xff]
        %v1630 = vld [vmem:[%s1619 + $0x50] sm:$0xff]
        %v1631 = vld [vmem:[%s1619 + $0x58] sm:$0xff]
        %v1632 = vld [vmem:[%s1619 + $0x60] sm:$0xff]
        %v1633 = vld [vmem:[%s1619 + $0x68] sm:$0xff]
        %v1634 = vld [vmem:[%s1619 + $0x70] sm:$0xff]
        %v1635 = vld [vmem:[%s1619 + $0x78] sm:$0xff]
        %v1636 = vadd.f32 %v1620, %v1557
        %v1637 = vadd.f32 %v1621, %v1560
        %v1638 = vadd.f32 %v1622, %v1565
        %v1639 = vadd.f32 %v1623, %v1568
        %v1640 = vadd.f32 %v1624, %v1573
        %v1641 = vadd.f32 %v1625, %v1576
        %v1642 = vadd.f32 %v1626, %v1581
        %v1643 = vadd.f32 %v1627, %v1584
        %v1644 = vadd.f32 %v1628, %v1589
        %v1645 = vadd.f32 %v1629, %v1592
        %v1646 = vadd.f32 %v1630, %v1597
        %v1647 = vadd.f32 %v1631, %v1600
        %v1648 = vadd.f32 %v1632, %v1605
        %v1649 = vadd.f32 %v1633, %v1608
        %v1650 = vadd.f32 %v1634, %v1613
        %v1651 = vadd.f32 %v1635, %v1616
        %1652 = vst.msk [vmem:[%s1619] sm:$0xff] %vm1049, %v1636
        %1653 = vst.msk [vmem:[%s1619 + $0x8] sm:$0xff] %vm1049, %v1637
        %1654 = vst.msk [vmem:[%s1619 + $0x10] sm:$0xff] %vm1049, %v1638
        %1655 = vst.msk [vmem:[%s1619 + $0x18] sm:$0xff] %vm1049, %v1639
        %1656 = vst.msk [vmem:[%s1619 + $0x20] sm:$0xff] %vm1049, %v1640
        %1657 = vst.msk [vmem:[%s1619 + $0x28] sm:$0xff] %vm1049, %v1641
        %1658 = vst.msk [vmem:[%s1619 + $0x30] sm:$0xff] %vm1049, %v1642
        %1659 = vst.msk [vmem:[%s1619 + $0x38] sm:$0xff] %vm1049, %v1643
        %1660 = vst.msk [vmem:[%s1619 + $0x40] sm:$0xff] %vm1049, %v1644
        %1661 = vst.msk [vmem:[%s1619 + $0x48] sm:$0xff] %vm1049, %v1645
        %1662 = vst.msk [vmem:[%s1619 + $0x50] sm:$0xff] %vm1049, %v1646
        %1663 = vst.msk [vmem:[%s1619 + $0x58] sm:$0xff] %vm1049, %v1647
        %1664 = vst.msk [vmem:[%s1619 + $0x60] sm:$0xff] %vm1049, %v1648
        %1665 = vst.msk [vmem:[%s1619 + $0x68] sm:$0xff] %vm1049, %v1649
        %1666 = vst.msk [vmem:[%s1619 + $0x70] sm:$0xff] %vm1049, %v1650
        %1667 = vst.msk [vmem:[%s1619 + $0x78] sm:$0xff] %vm1049, %v1651
        // Predicated region
        $region41: #{depthwise_separable_conv.1} parent=35 // pred_check
          %p1668 = pneg %p259
        $region42: #{depthwise_separable_conv.1} parent=35 // pred_check_branch
          %1670 = sbr.rel (%p1668) target = $region44
        $region43: #{depthwise_separable_conv.1} parent=35 // pred_region
          %v1671 = vld [vmem:[%s239] sm:$0xff]
          %v1672 = vld [vmem:[%s239 + $0x8] sm:$0xff]
          %v1673 = vld [vmem:[%s239 + $0x10] sm:$0xff]
          %v1674 = vld [vmem:[%s239 + $0x18] sm:$0xff]
          %v1675 = vld [vmem:[%s239 + $0x20] sm:$0xff]
          %v1676 = vld [vmem:[%s239 + $0x28] sm:$0xff]
          %v1677 = vld [vmem:[%s239 + $0x30] sm:$0xff]
          %v1678 = vld [vmem:[%s239 + $0x38] sm:$0xff]
          %v1679 = vld [vmem:[%s239 + $0x40] sm:$0xff]
          %v1680 = vld [vmem:[%s239 + $0x48] sm:$0xff]
          %v1681 = vld [vmem:[%s239 + $0x50] sm:$0xff]
          %v1682 = vld [vmem:[%s239 + $0x58] sm:$0xff]
          %v1683 = vld [vmem:[%s239 + $0x60] sm:$0xff]
          %v1684 = vld [vmem:[%s239 + $0x68] sm:$0xff]
          %v1685 = vld [vmem:[%s239 + $0x70] sm:$0xff]
          %v1686 = vld [vmem:[%s239 + $0x78] sm:$0xff]
          %v1687 = vld [vmem:[%s239 + $0x80] sm:$0xff]
          %v1688 = vld [vmem:[%s239 + $0x88] sm:$0xff]
          %v1689 = vld [vmem:[%s239 + $0x90] sm:$0xff]
          %v1690 = vld [vmem:[%s239 + $0x98] sm:$0xff]
          %v1691 = vld [vmem:[%s239 + $0xa0] sm:$0xff]
          %v1692 = vld [vmem:[%s239 + $0xa8] sm:$0xff]
          %v1693 = vld [vmem:[%s239 + $0xb0] sm:$0xff]
          %v1694 = vld [vmem:[%s239 + $0xb8] sm:$0xff]
          %v1695 = vld [vmem:[%s239 + $0xc0] sm:$0xff]
          %v1696 = vld [vmem:[%s239 + $0xc8] sm:$0xff]
          %v1697 = vld [vmem:[%s239 + $0xd0] sm:$0xff]
          %v1698 = vld [vmem:[%s239 + $0xd8] sm:$0xff]
          %v1699 = vld [vmem:[%s239 + $0xe0] sm:$0xff]
          %v1700 = vld [vmem:[%s239 + $0xe8] sm:$0xff]
          %v1701 = vld [vmem:[%s239 + $0xf0] sm:$0xff]
          %v1702 = vld [vmem:[%s239 + $0xf8] sm:$0xff]
          %v1703 = vld [vmem:[%s3] sm:$0x1]
          %v1705 = vlaneseq
          %v1706 = vshrl.u32 %v1705, 7
          %v1707 = vsub.s32 0, %v1706
          %v1708 = vrot.slane %v1703, %v1707
          %v1710 = vadd.f32 %v1671, %v1708
          %v1711 = vadd.f32 %v1672, %v1708
          %v1712 = vadd.f32 %v1673, %v1708
          %v1713 = vadd.f32 %v1674, %v1708
          %v1714 = vadd.f32 %v1675, %v1708
          %v1715 = vadd.f32 %v1676, %v1708
          %v1716 = vadd.f32 %v1677, %v1708
          %v1717 = vadd.f32 %v1678, %v1708
          %v1718 = vadd.f32 %v1679, %v1708
          %v1719 = vadd.f32 %v1680, %v1708
          %v1720 = vadd.f32 %v1681, %v1708
          %v1721 = vadd.f32 %v1682, %v1708
          %v1722 = vadd.f32 %v1683, %v1708
          %v1723 = vadd.f32 %v1684, %v1708
          %v1724 = vadd.f32 %v1685, %v1708
          %v1725 = vadd.f32 %v1686, %v1708
          %v1726 = vadd.f32 %v1687, %v1708
          %v1727 = vadd.f32 %v1688, %v1708
          %v1728 = vadd.f32 %v1689, %v1708
          %v1729 = vadd.f32 %v1690, %v1708
          %v1730 = vadd.f32 %v1691, %v1708
          %v1731 = vadd.f32 %v1692, %v1708
          %v1732 = vadd.f32 %v1693, %v1708
          %v1733 = vadd.f32 %v1694, %v1708
          %v1734 = vadd.f32 %v1695, %v1708
          %v1735 = vadd.f32 %v1696, %v1708
          %v1736 = vadd.f32 %v1697, %v1708
          %v1737 = vadd.f32 %v1698, %v1708
          %v1738 = vadd.f32 %v1699, %v1708
          %v1739 = vadd.f32 %v1700, %v1708
          %v1740 = vadd.f32 %v1701, %v1708
          %v1741 = vadd.f32 %v1702, %v1708
          %1742 = vst.msk [vmem:[%s239] sm:$0xff] %vm1049, %v1710
          %1743 = vst.msk [vmem:[%s239 + $0x8] sm:$0xff] %vm1049, %v1711
          %1744 = vst.msk [vmem:[%s239 + $0x10] sm:$0xff] %vm1049, %v1712
          %1745 = vst.msk [vmem:[%s239 + $0x18] sm:$0xff] %vm1049, %v1713
          %1746 = vst.msk [vmem:[%s239 + $0x20] sm:$0xff] %vm1049, %v1714
          %1747 = vst.msk [vmem:[%s239 + $0x28] sm:$0xff] %vm1049, %v1715
          %1748 = vst.msk [vmem:[%s239 + $0x30] sm:$0xff] %vm1049, %v1716
          %1749 = vst.msk [vmem:[%s239 + $0x38] sm:$0xff] %vm1049, %v1717
          %1750 = vst.msk [vmem:[%s239 + $0x40] sm:$0xff] %vm1049, %v1718
          %1751 = vst.msk [vmem:[%s239 + $0x48] sm:$0xff] %vm1049, %v1719
          %1752 = vst.msk [vmem:[%s239 + $0x50] sm:$0xff] %vm1049, %v1720
          %1753 = vst.msk [vmem:[%s239 + $0x58] sm:$0xff] %vm1049, %v1721
          %1754 = vst.msk [vmem:[%s239 + $0x60] sm:$0xff] %vm1049, %v1722
          %1755 = vst.msk [vmem:[%s239 + $0x68] sm:$0xff] %vm1049, %v1723
          %1756 = vst.msk [vmem:[%s239 + $0x70] sm:$0xff] %vm1049, %v1724
          %1757 = vst.msk [vmem:[%s239 + $0x78] sm:$0xff] %vm1049, %v1725
          %1758 = vst.msk [vmem:[%s239 + $0x80] sm:$0xff] %vm1049, %v1726
          %1759 = vst.msk [vmem:[%s239 + $0x88] sm:$0xff] %vm1049, %v1727
          %1760 = vst.msk [vmem:[%s239 + $0x90] sm:$0xff] %vm1049, %v1728
          %1761 = vst.msk [vmem:[%s239 + $0x98] sm:$0xff] %vm1049, %v1729
          %1762 = vst.msk [vmem:[%s239 + $0xa0] sm:$0xff] %vm1049, %v1730
          %1763 = vst.msk [vmem:[%s239 + $0xa8] sm:$0xff] %vm1049, %v1731
          %1764 = vst.msk [vmem:[%s239 + $0xb0] sm:$0xff] %vm1049, %v1732
          %1765 = vst.msk [vmem:[%s239 + $0xb8] sm:$0xff] %vm1049, %v1733
          %1766 = vst.msk [vmem:[%s239 + $0xc0] sm:$0xff] %vm1049, %v1734
          %1767 = vst.msk [vmem:[%s239 + $0xc8] sm:$0xff] %vm1049, %v1735
          %1768 = vst.msk [vmem:[%s239 + $0xd0] sm:$0xff] %vm1049, %v1736
          %1769 = vst.msk [vmem:[%s239 + $0xd8] sm:$0xff] %vm1049, %v1737
          %1770 = vst.msk [vmem:[%s239 + $0xe0] sm:$0xff] %vm1049, %v1738
          %1771 = vst.msk [vmem:[%s239 + $0xe8] sm:$0xff] %vm1049, %v1739
          %1772 = vst.msk [vmem:[%s239 + $0xf0] sm:$0xff] %vm1049, %v1740
          %1773 = vst.msk [vmem:[%s239 + $0xf8] sm:$0xff] %vm1049, %v1741
        $region44: #{depthwise_separable_conv.1} parent=35 // pred_fallthru
          _
        %s1774 = sand.u32 %s139, 1
        %s1775 = scalar_lea.sflag [#allocation4], %s1774
        %s1776 = sand.u32 %s139, 1
        %s1777 = smul.addr %s1776, 256
        %s1778 = scalar_lea.vmem [#allocation3], %s1777
        // Predicated region
        $region45: #{depthwise_separable_conv.1} parent=35 // pred_check
          %p1779 = pneg %p149
        $region46: #{depthwise_separable_conv.1} parent=35 // pred_check_branch
          %1781 = sbr.rel (%p1779) target = $region48
        $region47: #{depthwise_separable_conv.1} parent=35 // pred_region
          %s1783 = ssub.s32 4096, 4096
          %1784 = vsyncadd %s1775, %s1783
          %s1785 = smul.addr %s22, 32
          %s1786 = smul.addr %s1785, 128
          %s1787 = scalar_lea.hbm %s4, %s1786
          %s1788 = sshll.u32 %s1778, 4
          %s1789 = int_to_ptr.vmem [resolvable:$true] %s1788
          %1794 = dma.vmem_to_hbm [thread:$0]  %s1789, 4096, %s1787, %s1775, 128, 128, 8
        $region48: #{depthwise_separable_conv.1} parent=35 // pred_fallthru
          _
      $region36: #{depthwise_separable_conv.1} parent=5 // pred_fallthru
        _
      %p1795 = scmp.le.s32.totalorder 2, %s13
      // Predicated region
      $region49: #{depthwise_separable_conv.1} parent=5 // pred_check
        %p1796 = pneg %p1795
      $region50: #{depthwise_separable_conv.1} parent=5 // pred_check_branch
        %1798 = sbr.rel (%p1796) target = $region52
      $region51: #{depthwise_separable_conv.1} parent=5 // pred_region
        %s1799 = ssub.s32 %s13, 2
        // Predicated region
        $region53: #{depthwise_separable_conv.1} parent=51 // pred_check
          %p1800 = pneg %p155
        $region54: #{depthwise_separable_conv.1} parent=51 // pred_check_branch
          %1802 = sbr.rel (%p1800) target = $region56
        $region55: #{depthwise_separable_conv.1} parent=51 // pred_region
          %s1803 = sand.u32 %s140, 1
          %s1804 = scalar_lea.sflag [#allocation4], %s1803
          %s1805 = sand.u32 %s140, 1
          %s1806 = smul.addr %s1805, 256
          %s1807 = scalar_lea.vmem [#allocation3], %s1806
          %1808 = dma.done %s1804, 4096
        $region56: #{depthwise_separable_conv.1} parent=51 // pred_fallthru
          _
      $region52: #{depthwise_separable_conv.1} parent=5 // pred_fallthru
        _
    $region6: #{depthwise_separable_conv.1} parent=1 // loop_footer
      %s17 = sadd.s32 1, %s13
    $region7: #{depthwise_separable_conv.1} parent=1 // loop_footer_branch
      %12 = sbr.rel target = $region3
    $region8: #{depthwise_separable_conv.1} parent=1 // loop_exit
      _
    %1809 = vsyncpa [#allocation4], 1
    %s1810 = scalar_lea.sflag [#allocation4], 1
    %1811 = vsyncpa %s1810, 1

</llo_original>
